<compile_context>
chip_gen: v7x
topology: tpu7x:2x2x1
jax: 0.10.0
libtpu: 0.0.40
codegen_flags: <defaults>
</compile_context>

<pallas_src>
import math

import jax
import jax.numpy as jnp
from jax import lax
from jax.experimental import pallas as pl
from jax.experimental.pallas import tpu as pltpu


def _self_attention_3d_kernel(gamma_ref, qs_ref, x_ref, v_ref, o_ref):
    """One (batch, query-tile) step.

    gamma_ref : (1, 1)      f32   SMEM scalar
    qs_ref    : (TQ, C)     bf16  fused-query tile:  x^T (Wq^T Wk) + bq^T Wk
    x_ref     : (C, N)      f32   this batch element (keys + residual source)
    v_ref     : (C+1, N)    bf16  value projection with an appended ones-row
    o_ref     : (C, TQ)     f32   lane-dense output tile
    """
    C, TQ = o_ref.shape
    i0 = pl.multiple_of(pl.program_id(1) * TQ, TQ)

    # Keys: bf16 operand for the MXU (cast is cheap; x stays f32 for the residual).
    keys = x_ref[...].astype(jnp.bfloat16)                                # (C, N)

    # scores_eff[i, j] = qs_i . x_j   (contraction depth C, bf16 MXU, f32 acc)
    scores = jnp.dot(qs_ref[...], keys,
                     preferred_element_type=jnp.float32)                  # (TQ, N)

    # Unnormalized, numerically-stable softmax weights (normalization deferred).
    m = jnp.max(scores, axis=-1, keepdims=True)
    p = jnp.exp(scores - m)                                               # (TQ, N)

    # out_aug[c, i] = sum_j v_aug[c, j] * p[i, j]   (A @ B^T pattern on the MXU).
    # Row C of v_aug is all ones, so out_aug[C, :] is the softmax denominator as a
    # (1, TQ) row — no transpose and no per-element divide needed.
    out_aug = lax.dot_general(v_ref[...], p.astype(jnp.bfloat16),
                              (((1,), (1,)), ((), ())),
                              preferred_element_type=jnp.float32)         # (C+1, TQ)

    inv_row = pl.reciprocal(out_aug[C:C + 1, :], approx=True)             # (1, TQ)
    x_tile = x_ref[:, pl.ds(i0, TQ)]                                      # (C, TQ)
    o_ref[...] = (gamma_ref[0, 0] * inv_row) * out_aug[:C, :] + x_tile


def _pick_tq(N):
    """Largest 128-multiple tile (<=256) dividing N; keeps stores lane-dense and the
    (TQ, N) scores tile bounded."""
    for t in (256, 128):
        if N % t == 0:
            return t
    # TODO(synk): pad N to a multiple of 128 (with masking) for awkward spatial
    # sizes instead of a single full-width tile.
    return N


def self_attention_3d(x, wq, bq, wk, bk, wv, bv, gamma):
    """x: (B, C, D, H, W). Conv weights in PyTorch (out, in) layout (1x1x1 kernels
    squeezed). gamma: scalar. Returns (B, C, D, H, W) float32."""
    B, C, D, H, W = x.shape
    N = D * H * W

    xf = x.reshape(B, C, N).astype(jnp.float32)

    # ---- Hoisted projections (once per call, plain XLA; never re-done per tile) ----
    # Fused query/key weights.  Terms of q_i.k_j that are constant per query row
    # (bk^T Wq x_i + bq.bk) drop out under softmax over keys, so:
    #   scores_eff[i, j] = (x_i^T Wq^T Wk + bq^T Wk) . x_j
    M = jnp.dot(wq.T, wk)                                        # (C, C)
    u = jnp.dot(wk.T, bq)                                        # (C,)
    qs = jnp.einsum('bcn,ce->bne', xf, M) + u[None, None, :]     # (B, N, C)

    v = jnp.einsum('oc,bcn->bon', wv, xf) + bv[None, :, None]    # (B, C, N)
    # Ones-row so the attention denominator falls out of the AV matmul as (1, TQ).
    v_aug = jnp.concatenate([v, jnp.ones((B, 1, N), v.dtype)], axis=1)   # (B, C+1, N)

    qs_bf = qs.astype(jnp.bfloat16)
    v_bf = v_aug.astype(jnp.bfloat16)
    gamma2 = jnp.asarray(gamma, jnp.float32).reshape(1, 1)

    TQ = _pick_tq(N)
    n_q = N // TQ

    out = pl.pallas_call(
        _self_attention_3d_kernel,
        out_shape=jax.ShapeDtypeStruct((B, C, N), jnp.float32),
        grid=(B, n_q),
        in_specs=[
            pl.BlockSpec(memory_space=pltpu.MemorySpace.SMEM),         # gamma (1,1)
            pl.BlockSpec((None, TQ, C), lambda b, q: (b, q, 0)),       # fused-query tile
            pl.BlockSpec((None, C, N), lambda b, q: (b, 0, 0)),        # x (resident per batch)
            pl.BlockSpec((None, C + 1, N), lambda b, q: (b, 0, 0)),    # v + ones row (resident)
        ],
        out_specs=pl.BlockSpec((None, C, TQ), lambda b, q: (b, 0, q)),  # lane-dense
        compiler_params=pltpu.CompilerParams(
            dimension_semantics=("parallel", "parallel"),
            vmem_limit_bytes=48 * 1024 * 1024),
    )(gamma2, qs_bf, xf, v_bf)

    return out.reshape(B, C, D, H, W)


def _reference(x, wq, bq, wk, bk, wv, bv, gamma):
    """Pure-JAX reference mirroring the PyTorch forward (f32, HIGHEST precision)."""
    P = jax.lax.Precision.HIGHEST
    B, C, D, H, W = x.shape
    N = D * H * W
    xf = x.reshape(B, C, N).astype(jnp.float32)
    q = jnp.einsum('oc,bcn->bon', wq, xf, precision=P) + bq[None, :, None]
    k = jnp.einsum('oc,bcn->bon', wk, xf, precision=P) + bk[None, :, None]
    v = jnp.einsum('oc,bcn->bon', wv, xf, precision=P) + bv[None, :, None]
    scores = jnp.einsum('bci,bcj->bij', q, k, precision=P)     # (B, N, N)
    attn = jax.nn.softmax(scores, axis=-1)
    out = jnp.einsum('bcj,bij->bci', v, attn, precision=P)     # (B, C, N)
    return (gamma * out + xf).reshape(B, C, D, H, W)


def _init_conv1x1(key, c_in, c_out):
    """Deterministic init mimicking torch.nn.Conv3d (uniform +/- 1/sqrt(fan_in))."""
    kw, kb = jax.random.split(key)
    bound = 1.0 / math.sqrt(c_in)
    w = jax.random.uniform(kw, (c_out, c_in), jnp.float32, -bound, bound)
    b = jax.random.uniform(kb, (c_out,), jnp.float32, -bound, bound)
    return w, b


if __name__ == "__main__":
    # in_channels must be >= 8 for the C//8 query/key projection; N = D*H*W = 512.
    B, C, D, H, W = 2, 32, 8, 8, 8

    root = jax.random.PRNGKey(0)
    kx, k1, k2, k3 = jax.random.split(root, 4)

    x = jax.random.normal(kx, (B, C, D, H, W), jnp.float32)
    wq, bq = _init_conv1x1(k1, C, C // 8)
    wk, bk = _init_conv1x1(k2, C, C // 8)
    wv, bv = _init_conv1x1(k3, C, C)
    # PyTorch initializes gamma to 0 (forward would just return x); use a nonzero
    # value so the attention path is actually exercised by the numerical check.
    gamma = jnp.float32(0.7)

    out = self_attention_3d(x, wq, bq, wk, bk, wv, bv, gamma)
    out = jax.block_until_ready(out)

    ref = _reference(x, wq, bq, wk, bk, wv, bv, gamma)
    assert out.shape == x.shape and out.dtype == jnp.float32
    # Tolerance accounts for bf16 MXU operands + approx reciprocal vs f32-HIGHEST ref.
    max_err = float(jnp.max(jnp.abs(out - ref)))
    assert jnp.allclose(out, ref, atol=3e-2, rtol=3e-2), \
        f"mismatch vs reference (max abs err {max_err})"

    print("KERNEL_OK")
</pallas_src>

<mosaic_0001>
module attributes {stable_mosaic.version = 11 : i64} {
  func.func @_self_attention_3d_kernel(%arg0: i32, %arg1: i32, %arg2: memref<1x1xf32, #tpu.memory_space<smem>>, %arg3: memref<1x256x32xbf16, #tpu.memory_space<vmem>>, %arg4: memref<1x32x512xf32, #tpu.memory_space<vmem>>, %arg5: memref<1x33x512xbf16, #tpu.memory_space<vmem>>, %arg6: memref<1x32x256xf32, #tpu.memory_space<vmem>>) attributes {dimension_semantics = [#tpu.dimension_semantics<parallel>, #tpu.dimension_semantics<parallel>], iteration_bounds = array<i64: 2, 2>, scalar_prefetch = 0 : i64, scratch_operands = 0 : i64, tpu.core_type = #tpu.core_type<tc>, window_params = [{transform_indices = @transform_0, window_bounds = array<i64: 1, 1>}, {transform_indices = @transform_1, window_bounds = array<i64: 1, 256, 32>}, {transform_indices = @transform_2, window_bounds = array<i64: 1, 32, 512>}, {transform_indices = @transform_3, window_bounds = array<i64: 1, 33, 512>}, {transform_indices = @transform_4, window_bounds = array<i64: 1, 32, 256>}]} {
    %c256_i32 = arith.constant 256 : i32
    %0 = arith.muli %arg1, %c256_i32 : i32
    %1 = tpu.assume_multiple %0, 256 : i32
    %c0 = arith.constant 0 : index
    %c0_0 = arith.constant 0 : index
    %c0_1 = arith.constant 0 : index
    %2 = vector.load %arg4[%c0, %c0_0, %c0_1] : memref<1x32x512xf32, #tpu.memory_space<vmem>>, vector<1x32x512xf32>
    %3 = vector.shape_cast %2 : vector<1x32x512xf32> to vector<32x512xf32>
    %4 = arith.truncf %3 : vector<32x512xf32> to vector<32x512xbf16>
    %c0_2 = arith.constant 0 : index
    %c0_3 = arith.constant 0 : index
    %c0_4 = arith.constant 0 : index
    %5 = vector.load %arg3[%c0_2, %c0_3, %c0_4] : memref<1x256x32xbf16, #tpu.memory_space<vmem>>, vector<1x256x32xbf16>
    %6 = vector.shape_cast %5 : vector<1x256x32xbf16> to vector<256x32xbf16>
    %cst = arith.constant dense<0.000000e+00> : vector<256x512xf32>
    %7 = tpu.matmul %6, %4, %cst {dimension_numbers = #tpu.dot_dimension_numbers<[1], [0], [0], [1], [0, 0, 1, 1], [], []>} : vector<256x32xbf16>, vector<32x512xbf16>, vector<256x512xf32> -> vector<256x512xf32>
    %cst_5 = arith.constant dense<0xFF800000> : vector<256xf32>
    %8 = vector.multi_reduction <maximumf>, %7, %cst_5 [1] : vector<256x512xf32> to vector<256xf32>
    %9 = vector.shape_cast %8 : vector<256xf32> to vector<256x1xf32>
    %10 = vector.broadcast %9 : vector<256x1xf32> to vector<256x512xf32>
    %11 = arith.subf %7, %10 : vector<256x512xf32>
    %12 = math.exp %11 : vector<256x512xf32>
    %c0_6 = arith.constant 0 : index
    %c0_7 = arith.constant 0 : index
    %c0_8 = arith.constant 0 : index
    %13 = vector.load %arg5[%c0_6, %c0_7, %c0_8] : memref<1x33x512xbf16, #tpu.memory_space<vmem>>, vector<1x33x512xbf16>
    %14 = vector.shape_cast %13 : vector<1x33x512xbf16> to vector<33x512xbf16>
    %15 = arith.truncf %12 : vector<256x512xf32> to vector<256x512xbf16>
    %cst_9 = arith.constant dense<0.000000e+00> : vector<33x256xf32>
    %16 = tpu.matmul %14, %15, %cst_9 {dimension_numbers = #tpu.dot_dimension_numbers<[1], [1], [0], [0], [0, 0, 1, 0], [], []>} : vector<33x512xbf16>, vector<256x512xbf16>, vector<33x256xf32> -> vector<33x256xf32>
    %17 = vector.extract_strided_slice %16 {offsets = [32, 0], sizes = [1, 256], strides = [1, 1]} : vector<33x256xf32> to vector<1x256xf32>
    %18 = tpu.reciprocal %17 {approx = true} : vector<1x256xf32> -> vector<1x256xf32>
    %c0_10 = arith.constant 0 : index
    %c0_11 = arith.constant 0 : index
    %19 = arith.index_cast %1 : i32 to index
    %20 = vector.load %arg4[%c0_10, %c0_11, %19] : memref<1x32x512xf32, #tpu.memory_space<vmem>>, vector<1x32x256xf32>
    %21 = vector.shape_cast %20 : vector<1x32x256xf32> to vector<32x256xf32>
    %c0_12 = arith.constant 0 : index
    %c0_13 = arith.constant 0 : index
    %22 = memref.load %arg2[%c0_12, %c0_13] : memref<1x1xf32, #tpu.memory_space<smem>>
    %23 = vector.broadcast %22 : f32 to vector<1x256xf32>
    %24 = arith.mulf %23, %18 : vector<1x256xf32>
    %25 = vector.extract_strided_slice %16 {offsets = [0, 0], sizes = [32, 256], strides = [1, 1]} : vector<33x256xf32> to vector<32x256xf32>
    %26 = vector.broadcast %24 : vector<1x256xf32> to vector<32x256xf32>
    %27 = arith.mulf %26, %25 : vector<32x256xf32>
    %28 = arith.addf %27, %21 : vector<32x256xf32>
    %c0_14 = arith.constant 0 : index
    %c0_15 = arith.constant 0 : index
    %c0_16 = arith.constant 0 : index
    %29 = vector.load %arg6[%c0_14, %c0_15, %c0_16] : memref<1x32x256xf32, #tpu.memory_space<vmem>>, vector<1x32x256xf32>
    %30 = vector.shape_cast %29 : vector<1x32x256xf32> to vector<32x256xf32>
    %31 = vector.shape_cast %28 : vector<32x256xf32> to vector<1x32x256xf32>
    tpu.vector_store %arg6[%c0_14, %c0_15, %c0_16], %31 {strides = array<i32>} : memref<1x32x256xf32, #tpu.memory_space<vmem>>, vector<1x32x256xf32>,
    return
  }
  func.func @transform_0(%arg0: i32, %arg1: i32) -> (i32, i32) {
    %c0_i32 = arith.constant 0 : i32
    %c0_i32_0 = arith.constant 0 : i32
    %c0_i32_1 = arith.constant 0 : i32
    return %c0_i32, %c0_i32_0 : i32, i32
  }
  func.func @transform_1(%arg0: i32, %arg1: i32) -> (i32, i32, i32) {
    %c0_i32 = arith.constant 0 : i32
    %c0_i32_0 = arith.constant 0 : i32
    return %arg0, %arg1, %c0_i32 : i32, i32, i32
  }
  func.func @transform_2(%arg0: i32, %arg1: i32) -> (i32, i32, i32) {
    %c0_i32 = arith.constant 0 : i32
    %c0_i32_0 = arith.constant 0 : i32
    %c0_i32_1 = arith.constant 0 : i32
    return %arg0, %c0_i32, %c0_i32_0 : i32, i32, i32
  }
  func.func @transform_3(%arg0: i32, %arg1: i32) -> (i32, i32, i32) {
    %c0_i32 = arith.constant 0 : i32
    %c0_i32_0 = arith.constant 0 : i32
    %c0_i32_1 = arith.constant 0 : i32
    return %arg0, %c0_i32, %c0_i32_0 : i32, i32, i32
  }
  func.func @transform_4(%arg0: i32, %arg1: i32) -> (i32, i32, i32) {
    %c0_i32 = arith.constant 0 : i32
    %c0_i32_0 = arith.constant 0 : i32
    return %arg0, %c0_i32, %arg1 : i32, i32, i32
  }
}

</mosaic_0001>

<llo_original>
// kernel: tpu_custom_call.1
$region0: #{tpu_custom_call.1}
  #allocation0 [shape = 'u32[]', space=smem, size = 0x4, offset = 0x4, fixed_abs, tag = 'smem constant byte address 0x4 - core index']
  #allocation1 [shape = 'u32[144,128]{1,0:T(1,128)}', space=vmem, size = 0x12000, scoped, tag = 'internal scratch']
  #allocation2 [shape = 'f32[1,1]{1,0:T(1,128)S(6)}', space=smem, size = 0x200, scoped, tag = 'scoped memory for tpu_custom_call.1']
  %s0 = inlined_call_operand.<no memory space> [shape: f32[1,1], index: 0, kind: input, shape index: {}]
  %s1 = inlined_call_operand.vmem [shape: bf16[2,512,32], index: 1, kind: input, shape index: {}]
  %s2 = inlined_call_operand.vmem [shape: f32[2,32,512], index: 2, kind: input, shape index: {}]
  %s3 = inlined_call_operand.vmem [shape: bf16[2,33,512], index: 3, kind: input, shape index: {}]
  %s4 = inlined_call_operand.hbm [shape: f32[2,32,512], index: 4, kind: output, shape index: {}]
  %s5 = sld [smem:[#allocation0]]
  $region49: #{tpu_custom_call.1} parent=0
    _
  %s7 = ssub.s32 1, %s5
  %s8 = scalar_select 0, %s7, %s5
  %9 = sst [smem:[#allocation2]] %s0
  $region1: #{tpu_custom_call.1} parent=0
    #allocation3 [shape = 'u8[65536]{0}', space=vmem, size = 0x10000, scoped, tag = 'output window, operand 0']
    #allocation4 [shape = 's32[2]{0}', space=sflag, size = 0x8, scoped, tag = 'scoped memory for tpu_custom_call.1']
    %10 = vsyncpa [#allocation4], 0
    %s11 = scalar_lea.sflag [#allocation4], 1
    %12 = vsyncpa %s11, 0
    loop: start=0, step=1, limit=6
    $region2: #{tpu_custom_call.1} parent=1 // loop_pre_header
      _
    $region3: #{tpu_custom_call.1} parent=1 // loop_header
      %s14 = sphi 0, %s18
      %p15 = scmp.ge.s32.totalorder %s14, 6
      %s21 = sphi 0, %s33
      %s22 = sphi 0, %s29
      %s23 = sphi 0, %s21
      %s24 = sphi 0, %s22
      %s25 = sphi 0, %s23
      %s26 = sphi 0, %s24
      %s34 = sphi 0, %s34
      %s36 = sphi 0, %s34
      %s37 = sphi 0, %s36
      %s51 = sphi 0, %s37
      %s59 = sphi 0, %s61
      %s62 = sphi 0, %s59
      %s63 = sphi 0, %s62
      %s79 = sphi 0, %s63
      %s85 = sphi 0, %s87
      %s88 = sphi 0, %s85
      %s89 = sphi 0, %s88
      %s105 = sphi 0, %s89
      %s111 = sphi 0, %s113
      %s114 = sphi 0, %s111
      %s115 = sphi 0, %s114
      %s131 = sphi 0, %s115
      %s139 = sphi 0, %s141
      %s142 = sphi 0, %s139
      %s143 = sphi 0, %s142
      %s159 = sphi 0, %s143
    $region4: #{tpu_custom_call.1} parent=1 // loop_header_branch
      %17 = sbr.rel (%p15) target = $region8
    $region5: #{tpu_custom_call.1} parent=1 // loop_body
      %s19 = ssub.s32 %s14, 1
      %s20 = ssub.s32 %s14, 2
      %s27 = sadd.s32 1, %s22
      %p28 = scmp.ge.s32.totalorder %s27, 2
      %s29 = scalar_select %p28, 0, %s27
      %s30 = sadd.s32 1, %s21
      %s31 = scalar_select %p28, %s30, %s21
      %p32 = scmp.ge.s32.totalorder %s31, 2
      %s33 = scalar_select %p32, 0, %s31
      %s35 = sadd.s32 %s34, 1
      %p38 = scmp.eq.s32.totalorder %s14, 3
      %p39 = scmp.ne.s32.totalorder %s34, %s36
      %p40 = scmp.eq.s32.totalorder %s14, 0
      %p41 = por %p39, %p40
      %p42 = scmp.ne.s32.totalorder %s34, %s36
      %p43 = scmp.eq.s32.totalorder %s19, 3
      %p44 = por %p42, %p43
      %p45 = scmp.ne.s32.totalorder %s36, %s37
      %p46 = scmp.eq.s32.totalorder %s19, 0
      %p47 = por %p45, %p46
      %p48 = scmp.ne.s32.totalorder %s36, %s37
      %p49 = scmp.eq.s32.totalorder %s20, 3
      %p50 = por %p48, %p49
      %p52 = scmp.ne.s32.totalorder %s37, %s51
      %p53 = scmp.eq.s32.totalorder %s20, 0
      %p54 = por %p52, %p53
      %s55 = ssub.s32 %s21, %s33
      %s56 = ssub.s32 %s22, %s29
      %s57 = sor.u32 %s55, %s56
      %p58 = scmp.eq.s32.totalorder %s57, 0
      %s60 = sadd.s32 %s59, 1
      %s61 = scalar_select %p58, %s59, %s60
      %p64 = pneg %p58
      %p65 = scmp.eq.s32.totalorder %s14, 3
      %p66 = por %p64, %p65
      %p67 = scmp.ne.s32.totalorder %s59, %s62
      %p68 = scmp.eq.s32.totalorder %s14, 0
      %p69 = por %p67, %p68
      %p70 = scmp.ne.s32.totalorder %s59, %s62
      %p71 = scmp.eq.s32.totalorder %s19, 3
      %p72 = por %p70, %p71
      %p73 = scmp.ne.s32.totalorder %s62, %s63
      %p74 = scmp.eq.s32.totalorder %s19, 0
      %p75 = por %p73, %p74
      %p76 = scmp.ne.s32.totalorder %s62, %s63
      %p77 = scmp.eq.s32.totalorder %s20, 3
      %p78 = por %p76, %p77
      %p80 = scmp.ne.s32.totalorder %s63, %s79
      %p81 = scmp.eq.s32.totalorder %s20, 0
      %p82 = por %p80, %p81
      %s83 = ssub.s32 %s21, %s33
      %p84 = scmp.eq.s32.totalorder %s83, 0
      %s86 = sadd.s32 %s85, 1
      %s87 = scalar_select %p84, %s85, %s86
      %p90 = pneg %p84
      %p91 = scmp.eq.s32.totalorder %s14, 3
      %p92 = por %p90, %p91
      %p93 = scmp.ne.s32.totalorder %s85, %s88
      %p94 = scmp.eq.s32.totalorder %s14, 0
      %p95 = por %p93, %p94
      %p96 = scmp.ne.s32.totalorder %s85, %s88
      %p97 = scmp.eq.s32.totalorder %s19, 3
      %p98 = por %p96, %p97
      %p99 = scmp.ne.s32.totalorder %s88, %s89
      %p100 = scmp.eq.s32.totalorder %s19, 0
      %p101 = por %p99, %p100
      %p102 = scmp.ne.s32.totalorder %s88, %s89
      %p103 = scmp.eq.s32.totalorder %s20, 3
      %p104 = por %p102, %p103
      %p106 = scmp.ne.s32.totalorder %s89, %s105
      %p107 = scmp.eq.s32.totalorder %s20, 0
      %p108 = por %p106, %p107
      %s109 = ssub.s32 %s21, %s33
      %p110 = scmp.eq.s32.totalorder %s109, 0
      %s112 = sadd.s32 %s111, 1
      %s113 = scalar_select %p110, %s111, %s112
      %p116 = pneg %p110
      %p117 = scmp.eq.s32.totalorder %s14, 3
      %p118 = por %p116, %p117
      %p119 = scmp.ne.s32.totalorder %s111, %s114
      %p120 = scmp.eq.s32.totalorder %s14, 0
      %p121 = por %p119, %p120
      %p122 = scmp.ne.s32.totalorder %s111, %s114
      %p123 = scmp.eq.s32.totalorder %s19, 3
      %p124 = por %p122, %p123
      %p125 = scmp.ne.s32.totalorder %s114, %s115
      %p126 = scmp.eq.s32.totalorder %s19, 0
      %p127 = por %p125, %p126
      %p128 = scmp.ne.s32.totalorder %s114, %s115
      %p129 = scmp.eq.s32.totalorder %s20, 3
      %p130 = por %p128, %p129
      %p132 = scmp.ne.s32.totalorder %s115, %s131
      %p133 = scmp.eq.s32.totalorder %s20, 0
      %p134 = por %p132, %p133
      %s135 = ssub.s32 %s21, %s33
      %s136 = ssub.s32 %s22, %s29
      %s137 = sor.u32 %s135, %s136
      %p138 = scmp.eq.s32.totalorder %s137, 0
      %s140 = sadd.s32 %s139, 1
      %s141 = scalar_select %p138, %s139, %s140
      %p144 = pneg %p138
      %p145 = scmp.eq.s32.totalorder %s14, 3
      %p146 = por %p144, %p145
      %p147 = scmp.ne.s32.totalorder %s139, %s142
      %p148 = scmp.eq.s32.totalorder %s14, 0
      %p149 = por %p147, %p148
      %p150 = scmp.ne.s32.totalorder %s139, %s142
      %p151 = scmp.eq.s32.totalorder %s19, 3
      %p152 = por %p150, %p151
      %p153 = scmp.ne.s32.totalorder %s142, %s143
      %p154 = scmp.eq.s32.totalorder %s19, 0
      %p155 = por %p153, %p154
      %p156 = scmp.ne.s32.totalorder %s142, %s143
      %p157 = scmp.eq.s32.totalorder %s20, 3
      %p158 = por %p156, %p157
      %p160 = scmp.ne.s32.totalorder %s143, %s159
      %p161 = scmp.eq.s32.totalorder %s20, 0
      %p162 = por %p160, %p161
      %p163 = scmp.le.s32.totalorder 1, %s14
      %p164 = scmp.lt.s32.totalorder %s14, 5
      %p165 = pnand %p163, %p164
      %p166 = pneg %p165
      // Predicated region
      $region9: #{tpu_custom_call.1} parent=5 // pred_check
        _
      $region10: #{tpu_custom_call.1} parent=5 // pred_check_branch
        %168 = sbr.rel (%p165) target = $region12
      $region11: #{tpu_custom_call.1} parent=5 // pred_region
        %s169 = ssub.s32 %s14, 1
        // Predicated region
        $region13: #{tpu_custom_call.1} parent=11 // pred_check
          %p170 = pneg %p47
        $region14: #{tpu_custom_call.1} parent=11 // pred_check_branch
          %172 = sbr.rel (%p170) target = $region16
        $region15: #{tpu_custom_call.1} parent=11 // pred_region
          _
        $region16: #{tpu_custom_call.1} parent=11 // pred_fallthru
          _
      $region12: #{tpu_custom_call.1} parent=5 // pred_fallthru
        _
      %p173 = scmp.lt.s32.totalorder %s14, 4
      // Predicated region
      $region17: #{tpu_custom_call.1} parent=5 // pred_check
        %p174 = pneg %p173
      $region18: #{tpu_custom_call.1} parent=5 // pred_check_branch
        %176 = sbr.rel (%p174) target = $region20
      $region19: #{tpu_custom_call.1} parent=5 // pred_region
        // Predicated region
        $region21: #{tpu_custom_call.1} parent=19 // pred_check
          %p177 = pneg %p69
        $region22: #{tpu_custom_call.1} parent=19 // pred_check_branch
          %179 = sbr.rel (%p177) target = $region24
        $region23: #{tpu_custom_call.1} parent=19 // pred_region
          %s180 = smul.u32 32, %s22
          %p181 = scmp.lt.s32.totalorder %s21, 1
          %s182 = scalar_select %p181, %s21, 1
          %p183 = scmp.lt.s32.totalorder %s180, 63
          %s184 = scalar_select %p183, %s180, 63
          %s185 = smul.addr %s182, 64
          %s186 = sadd.s32 %s184, %s185
          %s187 = smul.addr %s186, 4
          %s188 = scalar_lea.vmem %s1, %s187
          %s189 = smul.u32 32, %s22
        $region24: #{tpu_custom_call.1} parent=19 // pred_fallthru
          _
        // Predicated region
        $region25: #{tpu_custom_call.1} parent=19 // pred_check
          %p190 = pneg %p95
        $region26: #{tpu_custom_call.1} parent=19 // pred_check_branch
          %192 = sbr.rel (%p190) target = $region28
        $region27: #{tpu_custom_call.1} parent=19 // pred_region
          %p193 = scmp.lt.s32.totalorder %s21, 1
          %s194 = scalar_select %p193, %s21, 1
          %s195 = smul.addr %s194, 16
          %s196 = smul.addr %s195, 8
          %s197 = scalar_lea.vmem %s2, %s196
        $region28: #{tpu_custom_call.1} parent=19 // pred_fallthru
          _
        // Predicated region
        $region29: #{tpu_custom_call.1} parent=19 // pred_check
          %p198 = pneg %p121
        $region30: #{tpu_custom_call.1} parent=19 // pred_check_branch
          %200 = sbr.rel (%p198) target = $region32
        $region31: #{tpu_custom_call.1} parent=19 // pred_region
          %p201 = scmp.lt.s32.totalorder %s21, 1
          %s202 = scalar_select %p201, %s21, 1
          %s203 = smul.addr %s202, 20
          %s204 = smul.addr %s203, 4
          %s205 = scalar_lea.vmem %s3, %s204
        $region32: #{tpu_custom_call.1} parent=19 // pred_fallthru
          _
      $region20: #{tpu_custom_call.1} parent=5 // pred_fallthru
        _
      %p206 = scmp.le.s32.totalorder 1, %s14
      %p207 = scmp.lt.s32.totalorder %s14, 5
      %p208 = pnand %p206, %p207
      %p209 = pneg %p208
      // Predicated region
      $region33: #{tpu_custom_call.1} parent=5 // pred_check
        _
      $region34: #{tpu_custom_call.1} parent=5 // pred_check_branch
        %211 = sbr.rel (%p208) target = $region36
      $region35: #{tpu_custom_call.1} parent=5 // pred_region
        %s212 = ssub.s32 %s14, 1
        %p213 = pneg %p47
        %p214 = pneg %p44
        %s215 = smul.u32 32, %s24
        %p216 = scmp.lt.s32.totalorder %s23, 1
        %s217 = scalar_select %p216, %s23, 1
        %p218 = scmp.lt.s32.totalorder %s215, 63
        %s219 = scalar_select %p218, %s215, 63
        %s220 = smul.addr %s217, 64
        %s221 = sadd.s32 %s219, %s220
        %s222 = smul.addr %s221, 4
        %s223 = scalar_lea.vmem %s1, %s222
        %p224 = pneg %p75
        %p225 = pneg %p72
        %p226 = scmp.lt.s32.totalorder %s23, 1
        %s227 = scalar_select %p226, %s23, 1
        %s228 = smul.addr %s227, 16
        %s229 = smul.addr %s228, 8
        %s230 = scalar_lea.vmem %s2, %s229
        %p231 = pneg %p101
        %p232 = pneg %p98
        %p233 = scmp.lt.s32.totalorder %s23, 1
        %s234 = scalar_select %p233, %s23, 1
        %s235 = smul.addr %s234, 20
        %s236 = smul.addr %s235, 4
        %s237 = scalar_lea.vmem %s3, %s236
        %p238 = pneg %p127
        %p239 = pneg %p124
        %p240 = pneg %p155
        %p241 = pneg %p152
        %s242 = sand.u32 %s142, 1
        %s243 = scalar_lea.sflag [#allocation4], %s242
        %s244 = sand.u32 %s142, 1
        %s245 = smul.addr %s244, 64
        %s246 = scalar_lea.vmem [#allocation3], %s245
        %s247 = smul.u32 32, %s24
        %p248 = scmp.lt.s32.totalorder %s23, 1
        %s249 = scalar_select %p248, %s23, 1
        %p250 = scmp.lt.s32.totalorder %s247, 63
        %s251 = scalar_select %p250, %s247, 63
        %s252 = smul.addr %s249, 64
        %s253 = sadd.s32 %s251, %s252
        %s254 = smul.addr %s253, 4
        %s255 = scalar_lea.vmem %s1, %s254
        %s256 = smul.u32 32, %s24
        %p257 = scmp.lt.s32.totalorder %s23, 1
        %s258 = scalar_select %p257, %s23, 1
        %s259 = smul.addr %s258, 16
        %s260 = smul.addr %s259, 8
        %s261 = scalar_lea.vmem %s2, %s260
        %p262 = scmp.lt.s32.totalorder %s23, 1
        %s263 = scalar_select %p262, %s23, 1
        %s264 = smul.addr %s263, 20
        %s265 = smul.addr %s264, 4
        %s266 = scalar_lea.vmem %s3, %s265
        %s267 = smul.u32 2, %s24
        %s269 = smul.u32 %s24, 256
        %v270 = vld [vmem:[%s261] sm:$0xff]
        %v271 = vld [vmem:[%s261 + $0x8] sm:$0xff]
        %v272 = vld [vmem:[%s261 + $0x10] sm:$0xff]
        %v273 = vld [vmem:[%s261 + $0x18] sm:$0xff]
        %v274 = vld [vmem:[%s261 + $0x20] sm:$0xff]
        %v275 = vld [vmem:[%s261 + $0x28] sm:$0xff]
        %v276 = vld [vmem:[%s261 + $0x30] sm:$0xff]
        %v277 = vld [vmem:[%s261 + $0x38] sm:$0xff]
        %v278 = vld [vmem:[%s261 + $0x40] sm:$0xff]
        %v279 = vld [vmem:[%s261 + $0x48] sm:$0xff]
        %v280 = vld [vmem:[%s261 + $0x50] sm:$0xff]
        %v281 = vld [vmem:[%s261 + $0x58] sm:$0xff]
        %v282 = vld [vmem:[%s261 + $0x60] sm:$0xff]
        %v283 = vld [vmem:[%s261 + $0x68] sm:$0xff]
        %v284 = vld [vmem:[%s261 + $0x70] sm:$0xff]
        %v285 = vld [vmem:[%s261 + $0x78] sm:$0xff]
        %v286 = vpack.c.bf16 %v274, %v270
        %v287 = vpack.c.bf16 %v275, %v271
        %v288 = vpack.c.bf16 %v276, %v272
        %v289 = vpack.c.bf16 %v277, %v273
        %v290 = vpack.c.bf16 %v282, %v278
        %v291 = vpack.c.bf16 %v283, %v279
        %v292 = vpack.c.bf16 %v284, %v280
        %v293 = vpack.c.bf16 %v285, %v281
        %v294 = vld [vmem:[%s255] sm:$0xf]
        %v295 = vld [vmem:[%s255 + $0x4] sm:$0xf]
        %v296 = vld [vmem:[%s255 + $0x8] sm:$0xf]
        %v297 = vld [vmem:[%s255 + $0xc] sm:$0xf]
        %v298 = vld [vmem:[%s255 + $0x10] sm:$0xf]
        %v299 = vld [vmem:[%s255 + $0x14] sm:$0xf]
        %v300 = vld [vmem:[%s255 + $0x18] sm:$0xf]
        %v301 = vld [vmem:[%s255 + $0x1c] sm:$0xf]
        %v302 = vld [vmem:[%s255 + $0x20] sm:$0xf]
        %v303 = vld [vmem:[%s255 + $0x24] sm:$0xf]
        %v304 = vld [vmem:[%s255 + $0x28] sm:$0xf]
        %v305 = vld [vmem:[%s255 + $0x2c] sm:$0xf]
        %v306 = vld [vmem:[%s255 + $0x30] sm:$0xf]
        %v307 = vld [vmem:[%s255 + $0x34] sm:$0xf]
        %v308 = vld [vmem:[%s255 + $0x38] sm:$0xf]
        %v309 = vld [vmem:[%s255 + $0x3c] sm:$0xf]
        %v310 = vld [vmem:[%s255 + $0x40] sm:$0xf]
        %v311 = vld [vmem:[%s255 + $0x44] sm:$0xf]
        %v312 = vld [vmem:[%s255 + $0x48] sm:$0xf]
        %v313 = vld [vmem:[%s255 + $0x4c] sm:$0xf]
        %v314 = vld [vmem:[%s255 + $0x50] sm:$0xf]
        %v315 = vld [vmem:[%s255 + $0x54] sm:$0xf]
        %v316 = vld [vmem:[%s255 + $0x58] sm:$0xf]
        %v317 = vld [vmem:[%s255 + $0x5c] sm:$0xf]
        %v318 = vld [vmem:[%s255 + $0x60] sm:$0xf]
        %v319 = vld [vmem:[%s255 + $0x64] sm:$0xf]
        %v320 = vld [vmem:[%s255 + $0x68] sm:$0xf]
        %v321 = vld [vmem:[%s255 + $0x6c] sm:$0xf]
        %v322 = vld [vmem:[%s255 + $0x70] sm:$0xf]
        %v323 = vld [vmem:[%s255 + $0x74] sm:$0xf]
        %v324 = vld [vmem:[%s255 + $0x78] sm:$0xf]
        %v325 = vld [vmem:[%s255 + $0x7c] sm:$0xf]
        %v358 = vunpack.c.l.b16 %v294
        %v359 = vunpack.c.l.b16 %v295
        %v360 = vunpack.c.l.b16 %v296
        %v361 = vunpack.c.l.b16 %v297
        %v362 = vunpack.c.l.b16 %v298
        %v363 = vunpack.c.l.b16 %v299
        %v364 = vunpack.c.l.b16 %v300
        %v365 = vunpack.c.l.b16 %v301
        %v366 = vunpack.c.l.b16 %v302
        %v367 = vunpack.c.l.b16 %v303
        %v368 = vunpack.c.l.b16 %v304
        %v369 = vunpack.c.l.b16 %v305
        %v370 = vunpack.c.l.b16 %v306
        %v371 = vunpack.c.l.b16 %v307
        %v372 = vunpack.c.l.b16 %v308
        %v373 = vunpack.c.l.b16 %v309
        %v374 = vunpack.c.l.b16 %v310
        %v375 = vunpack.c.l.b16 %v311
        %v376 = vunpack.c.l.b16 %v312
        %v377 = vunpack.c.l.b16 %v313
        %v378 = vunpack.c.l.b16 %v314
        %v379 = vunpack.c.l.b16 %v315
        %v380 = vunpack.c.l.b16 %v316
        %v381 = vunpack.c.l.b16 %v317
        %v382 = vunpack.c.l.b16 %v318
        %v383 = vunpack.c.l.b16 %v319
        %v384 = vunpack.c.l.b16 %v320
        %v385 = vunpack.c.l.b16 %v321
        %v386 = vunpack.c.l.b16 %v322
        %v387 = vunpack.c.l.b16 %v323
        %v388 = vunpack.c.l.b16 %v324
        %v389 = vunpack.c.l.b16 %v325
        %v390 = vpack.c.b16 %v359, %v358
        %v391 = vpack.c.b16 %v361, %v360
        %v392 = vpack.c.b16 %v363, %v362
        %v393 = vpack.c.b16 %v365, %v364
        %v394 = vpack.c.b16 %v367, %v366
        %v395 = vpack.c.b16 %v369, %v368
        %v396 = vpack.c.b16 %v371, %v370
        %v397 = vpack.c.b16 %v373, %v372
        %v398 = vpack.c.b16 %v375, %v374
        %v399 = vpack.c.b16 %v377, %v376
        %v400 = vpack.c.b16 %v379, %v378
        %v401 = vpack.c.b16 %v381, %v380
        %v402 = vpack.c.b16 %v383, %v382
        %v403 = vpack.c.b16 %v385, %v384
        %v404 = vpack.c.b16 %v387, %v386
        %v405 = vpack.c.b16 %v389, %v388
        %vm406 = vcmask 261120
        %v408 = vsel %vm406, %v390, 0
        %v411 = vsel %vm406, %v391, 0
        %v414 = vsel %vm406, %v392, 0
        %v417 = vsel %vm406, %v393, 0
        %v420 = vsel %vm406, %v394, 0
        %v423 = vsel %vm406, %v395, 0
        %v426 = vsel %vm406, %v396, 0
        %v429 = vsel %vm406, %v397, 0
        %v432 = vsel %vm406, %v398, 0
        %v435 = vsel %vm406, %v399, 0
        %v438 = vsel %vm406, %v400, 0
        %v441 = vsel %vm406, %v401, 0
        %v444 = vsel %vm406, %v402, 0
        %v447 = vsel %vm406, %v403, 0
        %v450 = vsel %vm406, %v404, 0
        %v453 = vsel %vm406, %v405, 0
        %455 = vmatprep.subr.bf16.mxu0 %v287
        %456 = vmatpush1.bf16.msra.mxu0 %v286
        %457 = vmatprep.subr.bf16.mxu0 %v291
        %458 = vmatpush1.bf16.msra.mxu0 %v290
        %459 = vmatprep.subr.bf16.mxu0 0
        %460 = vmatpush1.bf16.msra.mxu0 0
        %461 = vmatprep.subr.bf16.mxu0 0
        %462 = vmatpush1.bf16.msra.mxu0 0
        %463 = vmatprep.subr.bf16.mxu0 0
        %464 = vmatpush1.bf16.msra.mxu0 0
        %465 = vmatprep.subr.bf16.mxu0 0
        %466 = vmatpush1.bf16.msra.mxu0 0
        %467 = vmatprep.subr.bf16.mxu0 0
        %468 = vmatpush1.bf16.msra.mxu0 0
        %469 = vmatprep.subr.bf16.mxu0 0
        %470 = vmatpush1.bf16.msra.mxu0 0
        %471 = vmatprep.subr.bf16.mxu0 0
        %472 = vmatpush1.bf16.msra.mxu0 0
        %473 = vmatprep.subr.bf16.mxu0 0
        %474 = vmatpush1.bf16.msra.mxu0 0
        %475 = vmatprep.subr.bf16.mxu0 0
        %476 = vmatpush1.bf16.msra.mxu0 0
        %477 = vmatprep.subr.bf16.mxu0 0
        %478 = vmatpush1.bf16.msra.mxu0 0
        %479 = vmatprep.subr.bf16.mxu0 0
        %480 = vmatpush1.bf16.msra.mxu0 0
        %481 = vmatprep.subr.bf16.mxu0 0
        %482 = vmatpush1.bf16.msra.mxu0 0
        %483 = vmatprep.subr.bf16.mxu0 0
        %484 = vmatpush1.bf16.msra.mxu0 0
        %485 = vmatprep.subr.bf16.mxu0 0
        %486 = vmatpush1.bf16.msra.mxu0 0
        %487 = vmatprep.mubr.bf16.mxu0 0
        %488 = vmatmul.mubr.bf16.gmra.mrb[0].mxu0 %v408
        %v489 = vpop.f32.mrb[0].mxu0
        %v490 = vadd.f32 0.0, %v489
        %v491 = vpop.f32.mrb[0].mxu0
        %v492 = vadd.f32 0.0, %v491
        %v493 = vpop.f32.mrb[0].mxu0
        %v494 = vadd.f32 0.0, %v493
        %v495 = vpop.f32.mrb[0].mxu0
        %v496 = vadd.f32 0.0, %v495
        %497 = vmatprep.mubr.bf16.mxu0 0
        %498 = vmatmul.mubr.bf16.gmra.mrb[0].mxu0 %v411
        %v499 = vpop.f32.mrb[0].mxu0
        %v500 = vadd.f32 0.0, %v499
        %v501 = vpop.f32.mrb[0].mxu0
        %v502 = vadd.f32 0.0, %v501
        %v503 = vpop.f32.mrb[0].mxu0
        %v504 = vadd.f32 0.0, %v503
        %v505 = vpop.f32.mrb[0].mxu0
        %v506 = vadd.f32 0.0, %v505
        %507 = vmatprep.mubr.bf16.mxu0 0
        %508 = vmatmul.mubr.bf16.gmra.mrb[0].mxu0 %v414
        %v509 = vpop.f32.mrb[0].mxu0
        %v510 = vadd.f32 0.0, %v509
        %v511 = vpop.f32.mrb[0].mxu0
        %v512 = vadd.f32 0.0, %v511
        %v513 = vpop.f32.mrb[0].mxu0
        %v514 = vadd.f32 0.0, %v513
        %v515 = vpop.f32.mrb[0].mxu0
        %v516 = vadd.f32 0.0, %v515
        %517 = vmatprep.mubr.bf16.mxu0 0
        %518 = vmatmul.mubr.bf16.gmra.mrb[0].mxu0 %v417
        %v519 = vpop.f32.mrb[0].mxu0
        %v520 = vadd.f32 0.0, %v519
        %v521 = vpop.f32.mrb[0].mxu0
        %v522 = vadd.f32 0.0, %v521
        %v523 = vpop.f32.mrb[0].mxu0
        %v524 = vadd.f32 0.0, %v523
        %v525 = vpop.f32.mrb[0].mxu0
        %v526 = vadd.f32 0.0, %v525
        %527 = vmatprep.mubr.bf16.mxu0 0
        %528 = vmatmul.mubr.bf16.gmra.mrb[0].mxu0 %v420
        %v529 = vpop.f32.mrb[0].mxu0
        %v530 = vadd.f32 0.0, %v529
        %v531 = vpop.f32.mrb[0].mxu0
        %v532 = vadd.f32 0.0, %v531
        %v533 = vpop.f32.mrb[0].mxu0
        %v534 = vadd.f32 0.0, %v533
        %v535 = vpop.f32.mrb[0].mxu0
        %v536 = vadd.f32 0.0, %v535
        %537 = vmatprep.mubr.bf16.mxu0 0
        %538 = vmatmul.mubr.bf16.gmra.mrb[0].mxu0 %v423
        %v539 = vpop.f32.mrb[0].mxu0
        %v540 = vadd.f32 0.0, %v539
        %v541 = vpop.f32.mrb[0].mxu0
        %v542 = vadd.f32 0.0, %v541
        %v543 = vpop.f32.mrb[0].mxu0
        %v544 = vadd.f32 0.0, %v543
        %v545 = vpop.f32.mrb[0].mxu0
        %v546 = vadd.f32 0.0, %v545
        %547 = vmatprep.mubr.bf16.mxu0 0
        %548 = vmatmul.mubr.bf16.gmra.mrb[0].mxu0 %v426
        %v549 = vpop.f32.mrb[0].mxu0
        %v550 = vadd.f32 0.0, %v549
        %v551 = vpop.f32.mrb[0].mxu0
        %v552 = vadd.f32 0.0, %v551
        %v553 = vpop.f32.mrb[0].mxu0
        %v554 = vadd.f32 0.0, %v553
        %v555 = vpop.f32.mrb[0].mxu0
        %v556 = vadd.f32 0.0, %v555
        %557 = vmatprep.mubr.bf16.mxu0 0
        %558 = vmatmul.mubr.bf16.gmra.mrb[0].mxu0 %v429
        %v559 = vpop.f32.mrb[0].mxu0
        %v560 = vadd.f32 0.0, %v559
        %v561 = vpop.f32.mrb[0].mxu0
        %v562 = vadd.f32 0.0, %v561
        %v563 = vpop.f32.mrb[0].mxu0
        %v564 = vadd.f32 0.0, %v563
        %v565 = vpop.f32.mrb[0].mxu0
        %v566 = vadd.f32 0.0, %v565
        %567 = vmatprep.mubr.bf16.mxu0 0
        %568 = vmatmul.mubr.bf16.gmra.mrb[0].mxu0 %v432
        %v569 = vpop.f32.mrb[0].mxu0
        %v570 = vadd.f32 0.0, %v569
        %v571 = vpop.f32.mrb[0].mxu0
        %v572 = vadd.f32 0.0, %v571
        %v573 = vpop.f32.mrb[0].mxu0
        %v574 = vadd.f32 0.0, %v573
        %v575 = vpop.f32.mrb[0].mxu0
        %v576 = vadd.f32 0.0, %v575
        %577 = vmatprep.mubr.bf16.mxu0 0
        %578 = vmatmul.mubr.bf16.gmra.mrb[0].mxu0 %v435
        %v579 = vpop.f32.mrb[0].mxu0
        %v580 = vadd.f32 0.0, %v579
        %v581 = vpop.f32.mrb[0].mxu0
        %v582 = vadd.f32 0.0, %v581
        %v583 = vpop.f32.mrb[0].mxu0
        %v584 = vadd.f32 0.0, %v583
        %v585 = vpop.f32.mrb[0].mxu0
        %v586 = vadd.f32 0.0, %v585
        %587 = vmatprep.mubr.bf16.mxu0 0
        %588 = vmatmul.mubr.bf16.gmra.mrb[0].mxu0 %v438
        %v589 = vpop.f32.mrb[0].mxu0
        %v590 = vadd.f32 0.0, %v589
        %v591 = vpop.f32.mrb[0].mxu0
        %v592 = vadd.f32 0.0, %v591
        %v593 = vpop.f32.mrb[0].mxu0
        %v594 = vadd.f32 0.0, %v593
        %v595 = vpop.f32.mrb[0].mxu0
        %v596 = vadd.f32 0.0, %v595
        %597 = vmatprep.mubr.bf16.mxu0 0
        %598 = vmatmul.mubr.bf16.gmra.mrb[0].mxu0 %v441
        %v599 = vpop.f32.mrb[0].mxu0
        %v600 = vadd.f32 0.0, %v599
        %v601 = vpop.f32.mrb[0].mxu0
        %v602 = vadd.f32 0.0, %v601
        %v603 = vpop.f32.mrb[0].mxu0
        %v604 = vadd.f32 0.0, %v603
        %v605 = vpop.f32.mrb[0].mxu0
        %v606 = vadd.f32 0.0, %v605
        %607 = vmatprep.mubr.bf16.mxu0 0
        %608 = vmatmul.mubr.bf16.gmra.mrb[0].mxu0 %v444
        %v609 = vpop.f32.mrb[0].mxu0
        %v610 = vadd.f32 0.0, %v609
        %v611 = vpop.f32.mrb[0].mxu0
        %v612 = vadd.f32 0.0, %v611
        %v613 = vpop.f32.mrb[0].mxu0
        %v614 = vadd.f32 0.0, %v613
        %v615 = vpop.f32.mrb[0].mxu0
        %v616 = vadd.f32 0.0, %v615
        %617 = vmatprep.mubr.bf16.mxu0 0
        %618 = vmatmul.mubr.bf16.gmra.mrb[0].mxu0 %v447
        %v619 = vpop.f32.mrb[0].mxu0
        %v620 = vadd.f32 0.0, %v619
        %v621 = vpop.f32.mrb[0].mxu0
        %v622 = vadd.f32 0.0, %v621
        %v623 = vpop.f32.mrb[0].mxu0
        %v624 = vadd.f32 0.0, %v623
        %v625 = vpop.f32.mrb[0].mxu0
        %v626 = vadd.f32 0.0, %v625
        %627 = vmatprep.mubr.bf16.mxu0 0
        %628 = vmatmul.mubr.bf16.gmra.mrb[0].mxu0 %v450
        %v629 = vpop.f32.mrb[0].mxu0
        %v630 = vadd.f32 0.0, %v629
        %v631 = vpop.f32.mrb[0].mxu0
        %v632 = vadd.f32 0.0, %v631
        %v633 = vpop.f32.mrb[0].mxu0
        %v634 = vadd.f32 0.0, %v633
        %v635 = vpop.f32.mrb[0].mxu0
        %v636 = vadd.f32 0.0, %v635
        %637 = vmatprep.mubr.bf16.mxu0 0
        %638 = vmatmul.mubr.bf16.gmra.mrb[0].mxu0 %v453
        %v639 = vpop.f32.mrb[0].mxu0
        %v640 = vadd.f32 0.0, %v639
        %v641 = vpop.f32.mrb[0].mxu0
        %v642 = vadd.f32 0.0, %v641
        %v643 = vpop.f32.mrb[0].mxu0
        %v644 = vadd.f32 0.0, %v643
        %v645 = vpop.f32.mrb[0].mxu0
        %v646 = vadd.f32 0.0, %v645
        %647 = vdwg.mxu0
        %648 = vmatprep.subr.bf16.mxu0 %v289
        %649 = vmatpush1.bf16.msra.mxu0 %v288
        %650 = vmatprep.subr.bf16.mxu0 %v293
        %651 = vmatpush1.bf16.msra.mxu0 %v292
        %652 = vmatprep.subr.bf16.mxu0 0
        %653 = vmatpush1.bf16.msra.mxu0 0
        %654 = vmatprep.subr.bf16.mxu0 0
        %655 = vmatpush1.bf16.msra.mxu0 0
        %656 = vmatprep.subr.bf16.mxu0 0
        %657 = vmatpush1.bf16.msra.mxu0 0
        %658 = vmatprep.subr.bf16.mxu0 0
        %659 = vmatpush1.bf16.msra.mxu0 0
        %660 = vmatprep.subr.bf16.mxu0 0
        %661 = vmatpush1.bf16.msra.mxu0 0
        %662 = vmatprep.subr.bf16.mxu0 0
        %663 = vmatpush1.bf16.msra.mxu0 0
        %664 = vmatprep.subr.bf16.mxu0 0
        %665 = vmatpush1.bf16.msra.mxu0 0
        %666 = vmatprep.subr.bf16.mxu0 0
        %667 = vmatpush1.bf16.msra.mxu0 0
        %668 = vmatprep.subr.bf16.mxu0 0
        %669 = vmatpush1.bf16.msra.mxu0 0
        %670 = vmatprep.subr.bf16.mxu0 0
        %671 = vmatpush1.bf16.msra.mxu0 0
        %672 = vmatprep.subr.bf16.mxu0 0
        %673 = vmatpush1.bf16.msra.mxu0 0
        %674 = vmatprep.subr.bf16.mxu0 0
        %675 = vmatpush1.bf16.msra.mxu0 0
        %676 = vmatprep.subr.bf16.mxu0 0
        %677 = vmatpush1.bf16.msra.mxu0 0
        %678 = vmatprep.subr.bf16.mxu0 0
        %679 = vmatpush1.bf16.msra.mxu0 0
        %680 = vmatprep.mubr.bf16.mxu0 0
        %681 = vmatmul.mubr.bf16.gmra.mrb[0].mxu0 %v408
        %v682 = vpop.f32.mrb[0].mxu0
        %v683 = vadd.f32 0.0, %v682
        %v684 = vpop.f32.mrb[0].mxu0
        %v685 = vadd.f32 0.0, %v684
        %v686 = vpop.f32.mrb[0].mxu0
        %v687 = vadd.f32 0.0, %v686
        %v688 = vpop.f32.mrb[0].mxu0
        %v689 = vadd.f32 0.0, %v688
        %690 = vmatprep.mubr.bf16.mxu0 0
        %691 = vmatmul.mubr.bf16.gmra.mrb[0].mxu0 %v411
        %v692 = vpop.f32.mrb[0].mxu0
        %v693 = vadd.f32 0.0, %v692
        %v694 = vpop.f32.mrb[0].mxu0
        %v695 = vadd.f32 0.0, %v694
        %v696 = vpop.f32.mrb[0].mxu0
        %v697 = vadd.f32 0.0, %v696
        %v698 = vpop.f32.mrb[0].mxu0
        %v699 = vadd.f32 0.0, %v698
        %700 = vmatprep.mubr.bf16.mxu0 0
        %701 = vmatmul.mubr.bf16.gmra.mrb[0].mxu0 %v414
        %v702 = vpop.f32.mrb[0].mxu0
        %v703 = vadd.f32 0.0, %v702
        %v704 = vpop.f32.mrb[0].mxu0
        %v705 = vadd.f32 0.0, %v704
        %v706 = vpop.f32.mrb[0].mxu0
        %v707 = vadd.f32 0.0, %v706
        %v708 = vpop.f32.mrb[0].mxu0
        %v709 = vadd.f32 0.0, %v708
        %710 = vmatprep.mubr.bf16.mxu0 0
        %711 = vmatmul.mubr.bf16.gmra.mrb[0].mxu0 %v417
        %v712 = vpop.f32.mrb[0].mxu0
        %v713 = vadd.f32 0.0, %v712
        %v714 = vpop.f32.mrb[0].mxu0
        %v715 = vadd.f32 0.0, %v714
        %v716 = vpop.f32.mrb[0].mxu0
        %v717 = vadd.f32 0.0, %v716
        %v718 = vpop.f32.mrb[0].mxu0
        %v719 = vadd.f32 0.0, %v718
        %720 = vmatprep.mubr.bf16.mxu0 0
        %721 = vmatmul.mubr.bf16.gmra.mrb[0].mxu0 %v420
        %v722 = vpop.f32.mrb[0].mxu0
        %v723 = vadd.f32 0.0, %v722
        %v724 = vpop.f32.mrb[0].mxu0
        %v725 = vadd.f32 0.0, %v724
        %v726 = vpop.f32.mrb[0].mxu0
        %v727 = vadd.f32 0.0, %v726
        %v728 = vpop.f32.mrb[0].mxu0
        %v729 = vadd.f32 0.0, %v728
        %730 = vmatprep.mubr.bf16.mxu0 0
        %731 = vmatmul.mubr.bf16.gmra.mrb[0].mxu0 %v423
        %v732 = vpop.f32.mrb[0].mxu0
        %v733 = vadd.f32 0.0, %v732
        %v734 = vpop.f32.mrb[0].mxu0
        %v735 = vadd.f32 0.0, %v734
        %v736 = vpop.f32.mrb[0].mxu0
        %v737 = vadd.f32 0.0, %v736
        %v738 = vpop.f32.mrb[0].mxu0
        %v739 = vadd.f32 0.0, %v738
        %740 = vmatprep.mubr.bf16.mxu0 0
        %741 = vmatmul.mubr.bf16.gmra.mrb[0].mxu0 %v426
        %v742 = vpop.f32.mrb[0].mxu0
        %v743 = vadd.f32 0.0, %v742
        %v744 = vpop.f32.mrb[0].mxu0
        %v745 = vadd.f32 0.0, %v744
        %v746 = vpop.f32.mrb[0].mxu0
        %v747 = vadd.f32 0.0, %v746
        %v748 = vpop.f32.mrb[0].mxu0
        %v749 = vadd.f32 0.0, %v748
        %750 = vmatprep.mubr.bf16.mxu0 0
        %751 = vmatmul.mubr.bf16.gmra.mrb[0].mxu0 %v429
        %v752 = vpop.f32.mrb[0].mxu0
        %v753 = vadd.f32 0.0, %v752
        %v754 = vpop.f32.mrb[0].mxu0
        %v755 = vadd.f32 0.0, %v754
        %v756 = vpop.f32.mrb[0].mxu0
        %v757 = vadd.f32 0.0, %v756
        %v758 = vpop.f32.mrb[0].mxu0
        %v759 = vadd.f32 0.0, %v758
        %760 = vmatprep.mubr.bf16.mxu0 0
        %761 = vmatmul.mubr.bf16.gmra.mrb[0].mxu0 %v432
        %v762 = vpop.f32.mrb[0].mxu0
        %v763 = vadd.f32 0.0, %v762
        %v764 = vpop.f32.mrb[0].mxu0
        %v765 = vadd.f32 0.0, %v764
        %v766 = vpop.f32.mrb[0].mxu0
        %v767 = vadd.f32 0.0, %v766
        %v768 = vpop.f32.mrb[0].mxu0
        %v769 = vadd.f32 0.0, %v768
        %770 = vmatprep.mubr.bf16.mxu0 0
        %771 = vmatmul.mubr.bf16.gmra.mrb[0].mxu0 %v435
        %v772 = vpop.f32.mrb[0].mxu0
        %v773 = vadd.f32 0.0, %v772
        %v774 = vpop.f32.mrb[0].mxu0
        %v775 = vadd.f32 0.0, %v774
        %v776 = vpop.f32.mrb[0].mxu0
        %v777 = vadd.f32 0.0, %v776
        %v778 = vpop.f32.mrb[0].mxu0
        %v779 = vadd.f32 0.0, %v778
        %780 = vmatprep.mubr.bf16.mxu0 0
        %781 = vmatmul.mubr.bf16.gmra.mrb[0].mxu0 %v438
        %v782 = vpop.f32.mrb[0].mxu0
        %v783 = vadd.f32 0.0, %v782
        %v784 = vpop.f32.mrb[0].mxu0
        %v785 = vadd.f32 0.0, %v784
        %v786 = vpop.f32.mrb[0].mxu0
        %v787 = vadd.f32 0.0, %v786
        %v788 = vpop.f32.mrb[0].mxu0
        %v789 = vadd.f32 0.0, %v788
        %790 = vmatprep.mubr.bf16.mxu0 0
        %791 = vmatmul.mubr.bf16.gmra.mrb[0].mxu0 %v441
        %v792 = vpop.f32.mrb[0].mxu0
        %v793 = vadd.f32 0.0, %v792
        %v794 = vpop.f32.mrb[0].mxu0
        %v795 = vadd.f32 0.0, %v794
        %v796 = vpop.f32.mrb[0].mxu0
        %v797 = vadd.f32 0.0, %v796
        %v798 = vpop.f32.mrb[0].mxu0
        %v799 = vadd.f32 0.0, %v798
        %800 = vmatprep.mubr.bf16.mxu0 0
        %801 = vmatmul.mubr.bf16.gmra.mrb[0].mxu0 %v444
        %v802 = vpop.f32.mrb[0].mxu0
        %v803 = vadd.f32 0.0, %v802
        %v804 = vpop.f32.mrb[0].mxu0
        %v805 = vadd.f32 0.0, %v804
        %v806 = vpop.f32.mrb[0].mxu0
        %v807 = vadd.f32 0.0, %v806
        %v808 = vpop.f32.mrb[0].mxu0
        %v809 = vadd.f32 0.0, %v808
        %810 = vmatprep.mubr.bf16.mxu0 0
        %811 = vmatmul.mubr.bf16.gmra.mrb[0].mxu0 %v447
        %v812 = vpop.f32.mrb[0].mxu0
        %v813 = vadd.f32 0.0, %v812
        %v814 = vpop.f32.mrb[0].mxu0
        %v815 = vadd.f32 0.0, %v814
        %v816 = vpop.f32.mrb[0].mxu0
        %v817 = vadd.f32 0.0, %v816
        %v818 = vpop.f32.mrb[0].mxu0
        %v819 = vadd.f32 0.0, %v818
        %820 = vmatprep.mubr.bf16.mxu0 0
        %821 = vmatmul.mubr.bf16.gmra.mrb[0].mxu0 %v450
        %v822 = vpop.f32.mrb[0].mxu0
        %v823 = vadd.f32 0.0, %v822
        %v824 = vpop.f32.mrb[0].mxu0
        %v825 = vadd.f32 0.0, %v824
        %v826 = vpop.f32.mrb[0].mxu0
        %v827 = vadd.f32 0.0, %v826
        %v828 = vpop.f32.mrb[0].mxu0
        %v829 = vadd.f32 0.0, %v828
        %830 = vmatprep.mubr.bf16.mxu0 0
        %831 = vmatmul.mubr.bf16.gmra.mrb[0].mxu0 %v453
        %v832 = vpop.f32.mrb[0].mxu0
        %v833 = vadd.f32 0.0, %v832
        %v834 = vpop.f32.mrb[0].mxu0
        %v835 = vadd.f32 0.0, %v834
        %v836 = vpop.f32.mrb[0].mxu0
        %v837 = vadd.f32 0.0, %v836
        %v838 = vpop.f32.mrb[0].mxu0
        %v839 = vadd.f32 0.0, %v838
        %840 = vdwg.mxu0
        %v841 = vmax.f32 %v490, %v492
        %v842 = vmax.f32 %v841, %v683
        %v843 = vmax.f32 %v842, %v685
        %844 = vmax.xlane.f32.xlu0 %v843
        %v845 = vpop.xlane.xlu0 %844
        %v846 = vmax.f32 %v494, %v496
        %v847 = vmax.f32 %v846, %v687
        %v848 = vmax.f32 %v847, %v689
        %849 = vmax.xlane.f32.xlu0 %v848
        %v850 = vpop.xlane.xlu0 %849
        %v851 = vmax.f32 %v500, %v502
        %v852 = vmax.f32 %v851, %v693
        %v853 = vmax.f32 %v852, %v695
        %854 = vmax.xlane.f32.xlu0 %v853
        %v855 = vpop.xlane.xlu0 %854
        %v856 = vmax.f32 %v504, %v506
        %v857 = vmax.f32 %v856, %v697
        %v858 = vmax.f32 %v857, %v699
        %859 = vmax.xlane.f32.xlu0 %v858
        %v860 = vpop.xlane.xlu0 %859
        %v861 = vmax.f32 %v510, %v512
        %v862 = vmax.f32 %v861, %v703
        %v863 = vmax.f32 %v862, %v705
        %864 = vmax.xlane.f32.xlu0 %v863
        %v865 = vpop.xlane.xlu0 %864
        %v866 = vmax.f32 %v514, %v516
        %v867 = vmax.f32 %v866, %v707
        %v868 = vmax.f32 %v867, %v709
        %869 = vmax.xlane.f32.xlu0 %v868
        %v870 = vpop.xlane.xlu0 %869
        %v871 = vmax.f32 %v520, %v522
        %v872 = vmax.f32 %v871, %v713
        %v873 = vmax.f32 %v872, %v715
        %874 = vmax.xlane.f32.xlu0 %v873
        %v875 = vpop.xlane.xlu0 %874
        %v876 = vmax.f32 %v524, %v526
        %v877 = vmax.f32 %v876, %v717
        %v878 = vmax.f32 %v877, %v719
        %879 = vmax.xlane.f32.xlu0 %v878
        %v880 = vpop.xlane.xlu0 %879
        %v881 = vmax.f32 %v530, %v532
        %v882 = vmax.f32 %v881, %v723
        %v883 = vmax.f32 %v882, %v725
        %884 = vmax.xlane.f32.xlu0 %v883
        %v885 = vpop.xlane.xlu0 %884
        %v886 = vmax.f32 %v534, %v536
        %v887 = vmax.f32 %v886, %v727
        %v888 = vmax.f32 %v887, %v729
        %889 = vmax.xlane.f32.xlu0 %v888
        %v890 = vpop.xlane.xlu0 %889
        %v891 = vmax.f32 %v540, %v542
        %v892 = vmax.f32 %v891, %v733
        %v893 = vmax.f32 %v892, %v735
        %894 = vmax.xlane.f32.xlu0 %v893
        %v895 = vpop.xlane.xlu0 %894
        %v896 = vmax.f32 %v544, %v546
        %v897 = vmax.f32 %v896, %v737
        %v898 = vmax.f32 %v897, %v739
        %899 = vmax.xlane.f32.xlu0 %v898
        %v900 = vpop.xlane.xlu0 %899
        %v901 = vmax.f32 %v550, %v552
        %v902 = vmax.f32 %v901, %v743
        %v903 = vmax.f32 %v902, %v745
        %904 = vmax.xlane.f32.xlu0 %v903
        %v905 = vpop.xlane.xlu0 %904
        %v906 = vmax.f32 %v554, %v556
        %v907 = vmax.f32 %v906, %v747
        %v908 = vmax.f32 %v907, %v749
        %909 = vmax.xlane.f32.xlu0 %v908
        %v910 = vpop.xlane.xlu0 %909
        %v911 = vmax.f32 %v560, %v562
        %v912 = vmax.f32 %v911, %v753
        %v913 = vmax.f32 %v912, %v755
        %914 = vmax.xlane.f32.xlu0 %v913
        %v915 = vpop.xlane.xlu0 %914
        %v916 = vmax.f32 %v564, %v566
        %v917 = vmax.f32 %v916, %v757
        %v918 = vmax.f32 %v917, %v759
        %919 = vmax.xlane.f32.xlu0 %v918
        %v920 = vpop.xlane.xlu0 %919
        %v921 = vmax.f32 %v570, %v572
        %v922 = vmax.f32 %v921, %v763
        %v923 = vmax.f32 %v922, %v765
        %924 = vmax.xlane.f32.xlu0 %v923
        %v925 = vpop.xlane.xlu0 %924
        %v926 = vmax.f32 %v574, %v576
        %v927 = vmax.f32 %v926, %v767
        %v928 = vmax.f32 %v927, %v769
        %929 = vmax.xlane.f32.xlu0 %v928
        %v930 = vpop.xlane.xlu0 %929
        %v931 = vmax.f32 %v580, %v582
        %v932 = vmax.f32 %v931, %v773
        %v933 = vmax.f32 %v932, %v775
        %934 = vmax.xlane.f32.xlu0 %v933
        %v935 = vpop.xlane.xlu0 %934
        %v936 = vmax.f32 %v584, %v586
        %v937 = vmax.f32 %v936, %v777
        %v938 = vmax.f32 %v937, %v779
        %939 = vmax.xlane.f32.xlu0 %v938
        %v940 = vpop.xlane.xlu0 %939
        %v941 = vmax.f32 %v590, %v592
        %v942 = vmax.f32 %v941, %v783
        %v943 = vmax.f32 %v942, %v785
        %944 = vmax.xlane.f32.xlu0 %v943
        %v945 = vpop.xlane.xlu0 %944
        %v946 = vmax.f32 %v594, %v596
        %v947 = vmax.f32 %v946, %v787
        %v948 = vmax.f32 %v947, %v789
        %949 = vmax.xlane.f32.xlu0 %v948
        %v950 = vpop.xlane.xlu0 %949
        %v951 = vmax.f32 %v600, %v602
        %v952 = vmax.f32 %v951, %v793
        %v953 = vmax.f32 %v952, %v795
        %954 = vmax.xlane.f32.xlu0 %v953
        %v955 = vpop.xlane.xlu0 %954
        %v956 = vmax.f32 %v604, %v606
        %v957 = vmax.f32 %v956, %v797
        %v958 = vmax.f32 %v957, %v799
        %959 = vmax.xlane.f32.xlu0 %v958
        %v960 = vpop.xlane.xlu0 %959
        %v961 = vmax.f32 %v610, %v612
        %v962 = vmax.f32 %v961, %v803
        %v963 = vmax.f32 %v962, %v805
        %964 = vmax.xlane.f32.xlu0 %v963
        %v965 = vpop.xlane.xlu0 %964
        %v966 = vmax.f32 %v614, %v616
        %v967 = vmax.f32 %v966, %v807
        %v968 = vmax.f32 %v967, %v809
        %969 = vmax.xlane.f32.xlu0 %v968
        %v970 = vpop.xlane.xlu0 %969
        %v971 = vmax.f32 %v620, %v622
        %v972 = vmax.f32 %v971, %v813
        %v973 = vmax.f32 %v972, %v815
        %974 = vmax.xlane.f32.xlu0 %v973
        %v975 = vpop.xlane.xlu0 %974
        %v976 = vmax.f32 %v624, %v626
        %v977 = vmax.f32 %v976, %v817
        %v978 = vmax.f32 %v977, %v819
        %979 = vmax.xlane.f32.xlu0 %v978
        %v980 = vpop.xlane.xlu0 %979
        %v981 = vmax.f32 %v630, %v632
        %v982 = vmax.f32 %v981, %v823
        %v983 = vmax.f32 %v982, %v825
        %984 = vmax.xlane.f32.xlu0 %v983
        %v985 = vpop.xlane.xlu0 %984
        %v986 = vmax.f32 %v634, %v636
        %v987 = vmax.f32 %v986, %v827
        %v988 = vmax.f32 %v987, %v829
        %989 = vmax.xlane.f32.xlu0 %v988
        %v990 = vpop.xlane.xlu0 %989
        %v991 = vmax.f32 %v640, %v642
        %v992 = vmax.f32 %v991, %v833
        %v993 = vmax.f32 %v992, %v835
        %994 = vmax.xlane.f32.xlu0 %v993
        %v995 = vpop.xlane.xlu0 %994
        %v996 = vmax.f32 %v644, %v646
        %v997 = vmax.f32 %v996, %v837
        %v998 = vmax.f32 %v997, %v839
        %999 = vmax.xlane.f32.xlu0 %v998
        %v1000 = vpop.xlane.xlu0 %999
        %v1001 = vsub.f32 %v490, %v845
        %v1002 = vsub.f32 %v492, %v845
        %v1003 = vsub.f32 %v683, %v845
        %v1004 = vsub.f32 %v685, %v845
        %v1005 = vsub.f32 %v494, %v850
        %v1006 = vsub.f32 %v496, %v850
        %v1007 = vsub.f32 %v687, %v850
        %v1008 = vsub.f32 %v689, %v850
        %v1009 = vsub.f32 %v500, %v855
        %v1010 = vsub.f32 %v502, %v855
        %v1011 = vsub.f32 %v693, %v855
        %v1012 = vsub.f32 %v695, %v855
        %v1013 = vsub.f32 %v504, %v860
        %v1014 = vsub.f32 %v506, %v860
        %v1015 = vsub.f32 %v697, %v860
        %v1016 = vsub.f32 %v699, %v860
        %v1017 = vsub.f32 %v510, %v865
        %v1018 = vsub.f32 %v512, %v865
        %v1019 = vsub.f32 %v703, %v865
        %v1020 = vsub.f32 %v705, %v865
        %v1021 = vsub.f32 %v514, %v870
        %v1022 = vsub.f32 %v516, %v870
        %v1023 = vsub.f32 %v707, %v870
        %v1024 = vsub.f32 %v709, %v870
        %v1025 = vsub.f32 %v520, %v875
        %v1026 = vsub.f32 %v522, %v875
        %v1027 = vsub.f32 %v713, %v875
        %v1028 = vsub.f32 %v715, %v875
        %v1029 = vsub.f32 %v524, %v880
        %v1030 = vsub.f32 %v526, %v880
        %v1031 = vsub.f32 %v717, %v880
        %v1032 = vsub.f32 %v719, %v880
        %v1033 = vsub.f32 %v530, %v885
        %v1034 = vsub.f32 %v532, %v885
        %v1035 = vsub.f32 %v723, %v885
        %v1036 = vsub.f32 %v725, %v885
        %v1037 = vsub.f32 %v534, %v890
        %v1038 = vsub.f32 %v536, %v890
        %v1039 = vsub.f32 %v727, %v890
        %v1040 = vsub.f32 %v729, %v890
        %v1041 = vsub.f32 %v540, %v895
        %v1042 = vsub.f32 %v542, %v895
        %v1043 = vsub.f32 %v733, %v895
        %v1044 = vsub.f32 %v735, %v895
        %v1045 = vsub.f32 %v544, %v900
        %v1046 = vsub.f32 %v546, %v900
        %v1047 = vsub.f32 %v737, %v900
        %v1048 = vsub.f32 %v739, %v900
        %v1049 = vsub.f32 %v550, %v905
        %v1050 = vsub.f32 %v552, %v905
        %v1051 = vsub.f32 %v743, %v905
        %v1052 = vsub.f32 %v745, %v905
        %v1053 = vsub.f32 %v554, %v910
        %v1054 = vsub.f32 %v556, %v910
        %v1055 = vsub.f32 %v747, %v910
        %v1056 = vsub.f32 %v749, %v910
        %v1057 = vsub.f32 %v560, %v915
        %v1058 = vsub.f32 %v562, %v915
        %v1059 = vsub.f32 %v753, %v915
        %v1060 = vsub.f32 %v755, %v915
        %v1061 = vsub.f32 %v564, %v920
        %v1062 = vsub.f32 %v566, %v920
        %v1063 = vsub.f32 %v757, %v920
        %v1064 = vsub.f32 %v759, %v920
        %v1065 = vsub.f32 %v570, %v925
        %v1066 = vsub.f32 %v572, %v925
        %v1067 = vsub.f32 %v763, %v925
        %v1068 = vsub.f32 %v765, %v925
        %v1069 = vsub.f32 %v574, %v930
        %v1070 = vsub.f32 %v576, %v930
        %v1071 = vsub.f32 %v767, %v930
        %v1072 = vsub.f32 %v769, %v930
        %v1073 = vsub.f32 %v580, %v935
        %v1074 = vsub.f32 %v582, %v935
        %v1075 = vsub.f32 %v773, %v935
        %v1076 = vsub.f32 %v775, %v935
        %v1077 = vsub.f32 %v584, %v940
        %v1078 = vsub.f32 %v586, %v940
        %v1079 = vsub.f32 %v777, %v940
        %v1080 = vsub.f32 %v779, %v940
        %v1081 = vsub.f32 %v590, %v945
        %v1082 = vsub.f32 %v592, %v945
        %v1083 = vsub.f32 %v783, %v945
        %v1084 = vsub.f32 %v785, %v945
        %v1085 = vsub.f32 %v594, %v950
        %v1086 = vsub.f32 %v596, %v950
        %v1087 = vsub.f32 %v787, %v950
        %v1088 = vsub.f32 %v789, %v950
        %v1089 = vsub.f32 %v600, %v955
        %v1090 = vsub.f32 %v602, %v955
        %v1091 = vsub.f32 %v793, %v955
        %v1092 = vsub.f32 %v795, %v955
        %v1093 = vsub.f32 %v604, %v960
        %v1094 = vsub.f32 %v606, %v960
        %v1095 = vsub.f32 %v797, %v960
        %v1096 = vsub.f32 %v799, %v960
        %v1097 = vsub.f32 %v610, %v965
        %v1098 = vsub.f32 %v612, %v965
        %v1099 = vsub.f32 %v803, %v965
        %v1100 = vsub.f32 %v805, %v965
        %v1101 = vsub.f32 %v614, %v970
        %v1102 = vsub.f32 %v616, %v970
        %v1103 = vsub.f32 %v807, %v970
        %v1104 = vsub.f32 %v809, %v970
        %v1105 = vsub.f32 %v620, %v975
        %v1106 = vsub.f32 %v622, %v975
        %v1107 = vsub.f32 %v813, %v975
        %v1108 = vsub.f32 %v815, %v975
        %v1109 = vsub.f32 %v624, %v980
        %v1110 = vsub.f32 %v626, %v980
        %v1111 = vsub.f32 %v817, %v980
        %v1112 = vsub.f32 %v819, %v980
        %v1113 = vsub.f32 %v630, %v985
        %v1114 = vsub.f32 %v632, %v985
        %v1115 = vsub.f32 %v823, %v985
        %v1116 = vsub.f32 %v825, %v985
        %v1117 = vsub.f32 %v634, %v990
        %v1118 = vsub.f32 %v636, %v990
        %v1119 = vsub.f32 %v827, %v990
        %v1120 = vsub.f32 %v829, %v990
        %v1121 = vsub.f32 %v640, %v995
        %v1122 = vsub.f32 %v642, %v995
        %v1123 = vsub.f32 %v833, %v995
        %v1124 = vsub.f32 %v835, %v995
        %v1125 = vsub.f32 %v644, %v1000
        %v1126 = vsub.f32 %v646, %v1000
        %v1127 = vsub.f32 %v837, %v1000
        %v1128 = vsub.f32 %v839, %v1000
        %v1129 = vmul.f32 %v1001, 1.442695
        %v1130 = vpow.pop %v1129
        %v1131 = vmul.f32 %v1002, 1.442695
        %v1132 = vpow.pop %v1131
        %v1133 = vmul.f32 %v1003, 1.442695
        %v1134 = vpow.pop %v1133
        %v1135 = vmul.f32 %v1004, 1.442695
        %v1136 = vpow.pop %v1135
        %v1137 = vmul.f32 %v1005, 1.442695
        %v1138 = vpow.pop %v1137
        %v1139 = vmul.f32 %v1006, 1.442695
        %v1140 = vpow.pop %v1139
        %v1141 = vmul.f32 %v1007, 1.442695
        %v1142 = vpow.pop %v1141
        %v1143 = vmul.f32 %v1008, 1.442695
        %v1144 = vpow.pop %v1143
        %v1145 = vmul.f32 %v1009, 1.442695
        %v1146 = vpow.pop %v1145
        %v1147 = vmul.f32 %v1010, 1.442695
        %v1148 = vpow.pop %v1147
        %v1149 = vmul.f32 %v1011, 1.442695
        %v1150 = vpow.pop %v1149
        %v1151 = vmul.f32 %v1012, 1.442695
        %v1152 = vpow.pop %v1151
        %v1153 = vmul.f32 %v1013, 1.442695
        %v1154 = vpow.pop %v1153
        %v1155 = vmul.f32 %v1014, 1.442695
        %v1156 = vpow.pop %v1155
        %v1157 = vmul.f32 %v1015, 1.442695
        %v1158 = vpow.pop %v1157
        %v1159 = vmul.f32 %v1016, 1.442695
        %v1160 = vpow.pop %v1159
        %v1161 = vmul.f32 %v1017, 1.442695
        %v1162 = vpow.pop %v1161
        %v1163 = vmul.f32 %v1018, 1.442695
        %v1164 = vpow.pop %v1163
        %v1165 = vmul.f32 %v1019, 1.442695
        %v1166 = vpow.pop %v1165
        %v1167 = vmul.f32 %v1020, 1.442695
        %v1168 = vpow.pop %v1167
        %v1169 = vmul.f32 %v1021, 1.442695
        %v1170 = vpow.pop %v1169
        %v1171 = vmul.f32 %v1022, 1.442695
        %v1172 = vpow.pop %v1171
        %v1173 = vmul.f32 %v1023, 1.442695
        %v1174 = vpow.pop %v1173
        %v1175 = vmul.f32 %v1024, 1.442695
        %v1176 = vpow.pop %v1175
        %v1177 = vmul.f32 %v1025, 1.442695
        %v1178 = vpow.pop %v1177
        %v1179 = vmul.f32 %v1026, 1.442695
        %v1180 = vpow.pop %v1179
        %v1181 = vmul.f32 %v1027, 1.442695
        %v1182 = vpow.pop %v1181
        %v1183 = vmul.f32 %v1028, 1.442695
        %v1184 = vpow.pop %v1183
        %v1185 = vmul.f32 %v1029, 1.442695
        %v1186 = vpow.pop %v1185
        %v1187 = vmul.f32 %v1030, 1.442695
        %v1188 = vpow.pop %v1187
        %v1189 = vmul.f32 %v1031, 1.442695
        %v1190 = vpow.pop %v1189
        %v1191 = vmul.f32 %v1032, 1.442695
        %v1192 = vpow.pop %v1191
        %v1193 = vmul.f32 %v1033, 1.442695
        %v1194 = vpow.pop %v1193
        %v1195 = vmul.f32 %v1034, 1.442695
        %v1196 = vpow.pop %v1195
        %v1197 = vmul.f32 %v1035, 1.442695
        %v1198 = vpow.pop %v1197
        %v1199 = vmul.f32 %v1036, 1.442695
        %v1200 = vpow.pop %v1199
        %v1201 = vmul.f32 %v1037, 1.442695
        %v1202 = vpow.pop %v1201
        %v1203 = vmul.f32 %v1038, 1.442695
        %v1204 = vpow.pop %v1203
        %v1205 = vmul.f32 %v1039, 1.442695
        %v1206 = vpow.pop %v1205
        %v1207 = vmul.f32 %v1040, 1.442695
        %v1208 = vpow.pop %v1207
        %v1209 = vmul.f32 %v1041, 1.442695
        %v1210 = vpow.pop %v1209
        %v1211 = vmul.f32 %v1042, 1.442695
        %v1212 = vpow.pop %v1211
        %v1213 = vmul.f32 %v1043, 1.442695
        %v1214 = vpow.pop %v1213
        %v1215 = vmul.f32 %v1044, 1.442695
        %v1216 = vpow.pop %v1215
        %v1217 = vmul.f32 %v1045, 1.442695
        %v1218 = vpow.pop %v1217
        %v1219 = vmul.f32 %v1046, 1.442695
        %v1220 = vpow.pop %v1219
        %v1221 = vmul.f32 %v1047, 1.442695
        %v1222 = vpow.pop %v1221
        %v1223 = vmul.f32 %v1048, 1.442695
        %v1224 = vpow.pop %v1223
        %v1225 = vmul.f32 %v1049, 1.442695
        %v1226 = vpow.pop %v1225
        %v1227 = vmul.f32 %v1050, 1.442695
        %v1228 = vpow.pop %v1227
        %v1229 = vmul.f32 %v1051, 1.442695
        %v1230 = vpow.pop %v1229
        %v1231 = vmul.f32 %v1052, 1.442695
        %v1232 = vpow.pop %v1231
        %v1233 = vmul.f32 %v1053, 1.442695
        %v1234 = vpow.pop %v1233
        %v1235 = vmul.f32 %v1054, 1.442695
        %v1236 = vpow.pop %v1235
        %v1237 = vmul.f32 %v1055, 1.442695
        %v1238 = vpow.pop %v1237
        %v1239 = vmul.f32 %v1056, 1.442695
        %v1240 = vpow.pop %v1239
        %v1241 = vmul.f32 %v1057, 1.442695
        %v1242 = vpow.pop %v1241
        %v1243 = vmul.f32 %v1058, 1.442695
        %v1244 = vpow.pop %v1243
        %v1245 = vmul.f32 %v1059, 1.442695
        %v1246 = vpow.pop %v1245
        %v1247 = vmul.f32 %v1060, 1.442695
        %v1248 = vpow.pop %v1247
        %v1249 = vmul.f32 %v1061, 1.442695
        %v1250 = vpow.pop %v1249
        %v1251 = vmul.f32 %v1062, 1.442695
        %v1252 = vpow.pop %v1251
        %v1253 = vmul.f32 %v1063, 1.442695
        %v1254 = vpow.pop %v1253
        %v1255 = vmul.f32 %v1064, 1.442695
        %v1256 = vpow.pop %v1255
        %v1257 = vmul.f32 %v1065, 1.442695
        %v1258 = vpow.pop %v1257
        %v1259 = vmul.f32 %v1066, 1.442695
        %v1260 = vpow.pop %v1259
        %v1261 = vmul.f32 %v1067, 1.442695
        %v1262 = vpow.pop %v1261
        %v1263 = vmul.f32 %v1068, 1.442695
        %v1264 = vpow.pop %v1263
        %v1265 = vmul.f32 %v1069, 1.442695
        %v1266 = vpow.pop %v1265
        %v1267 = vmul.f32 %v1070, 1.442695
        %v1268 = vpow.pop %v1267
        %v1269 = vmul.f32 %v1071, 1.442695
        %v1270 = vpow.pop %v1269
        %v1271 = vmul.f32 %v1072, 1.442695
        %v1272 = vpow.pop %v1271
        %v1273 = vmul.f32 %v1073, 1.442695
        %v1274 = vpow.pop %v1273
        %v1275 = vmul.f32 %v1074, 1.442695
        %v1276 = vpow.pop %v1275
        %v1277 = vmul.f32 %v1075, 1.442695
        %v1278 = vpow.pop %v1277
        %v1279 = vmul.f32 %v1076, 1.442695
        %v1280 = vpow.pop %v1279
        %v1281 = vmul.f32 %v1077, 1.442695
        %v1282 = vpow.pop %v1281
        %v1283 = vmul.f32 %v1078, 1.442695
        %v1284 = vpow.pop %v1283
        %v1285 = vmul.f32 %v1079, 1.442695
        %v1286 = vpow.pop %v1285
        %v1287 = vmul.f32 %v1080, 1.442695
        %v1288 = vpow.pop %v1287
        %v1289 = vmul.f32 %v1081, 1.442695
        %v1290 = vpow.pop %v1289
        %v1291 = vmul.f32 %v1082, 1.442695
        %v1292 = vpow.pop %v1291
        %v1293 = vmul.f32 %v1083, 1.442695
        %v1294 = vpow.pop %v1293
        %v1295 = vmul.f32 %v1084, 1.442695
        %v1296 = vpow.pop %v1295
        %v1297 = vmul.f32 %v1085, 1.442695
        %v1298 = vpow.pop %v1297
        %v1299 = vmul.f32 %v1086, 1.442695
        %v1300 = vpow.pop %v1299
        %v1301 = vmul.f32 %v1087, 1.442695
        %v1302 = vpow.pop %v1301
        %v1303 = vmul.f32 %v1088, 1.442695
        %v1304 = vpow.pop %v1303
        %v1305 = vmul.f32 %v1089, 1.442695
        %v1306 = vpow.pop %v1305
        %v1307 = vmul.f32 %v1090, 1.442695
        %v1308 = vpow.pop %v1307
        %v1309 = vmul.f32 %v1091, 1.442695
        %v1310 = vpow.pop %v1309
        %v1311 = vmul.f32 %v1092, 1.442695
        %v1312 = vpow.pop %v1311
        %v1313 = vmul.f32 %v1093, 1.442695
        %v1314 = vpow.pop %v1313
        %v1315 = vmul.f32 %v1094, 1.442695
        %v1316 = vpow.pop %v1315
        %v1317 = vmul.f32 %v1095, 1.442695
        %v1318 = vpow.pop %v1317
        %v1319 = vmul.f32 %v1096, 1.442695
        %v1320 = vpow.pop %v1319
        %v1321 = vmul.f32 %v1097, 1.442695
        %v1322 = vpow.pop %v1321
        %v1323 = vmul.f32 %v1098, 1.442695
        %v1324 = vpow.pop %v1323
        %v1325 = vmul.f32 %v1099, 1.442695
        %v1326 = vpow.pop %v1325
        %v1327 = vmul.f32 %v1100, 1.442695
        %v1328 = vpow.pop %v1327
        %v1329 = vmul.f32 %v1101, 1.442695
        %v1330 = vpow.pop %v1329
        %v1331 = vmul.f32 %v1102, 1.442695
        %v1332 = vpow.pop %v1331
        %v1333 = vmul.f32 %v1103, 1.442695
        %v1334 = vpow.pop %v1333
        %v1335 = vmul.f32 %v1104, 1.442695
        %v1336 = vpow.pop %v1335
        %v1337 = vmul.f32 %v1105, 1.442695
        %v1338 = vpow.pop %v1337
        %v1339 = vmul.f32 %v1106, 1.442695
        %v1340 = vpow.pop %v1339
        %v1341 = vmul.f32 %v1107, 1.442695
        %v1342 = vpow.pop %v1341
        %v1343 = vmul.f32 %v1108, 1.442695
        %v1344 = vpow.pop %v1343
        %v1345 = vmul.f32 %v1109, 1.442695
        %v1346 = vpow.pop %v1345
        %v1347 = vmul.f32 %v1110, 1.442695
        %v1348 = vpow.pop %v1347
        %v1349 = vmul.f32 %v1111, 1.442695
        %v1350 = vpow.pop %v1349
        %v1351 = vmul.f32 %v1112, 1.442695
        %v1352 = vpow.pop %v1351
        %v1353 = vmul.f32 %v1113, 1.442695
        %v1354 = vpow.pop %v1353
        %v1355 = vmul.f32 %v1114, 1.442695
        %v1356 = vpow.pop %v1355
        %v1357 = vmul.f32 %v1115, 1.442695
        %v1358 = vpow.pop %v1357
        %v1359 = vmul.f32 %v1116, 1.442695
        %v1360 = vpow.pop %v1359
        %v1361 = vmul.f32 %v1117, 1.442695
        %v1362 = vpow.pop %v1361
        %v1363 = vmul.f32 %v1118, 1.442695
        %v1364 = vpow.pop %v1363
        %v1365 = vmul.f32 %v1119, 1.442695
        %v1366 = vpow.pop %v1365
        %v1367 = vmul.f32 %v1120, 1.442695
        %v1368 = vpow.pop %v1367
        %v1369 = vmul.f32 %v1121, 1.442695
        %v1370 = vpow.pop %v1369
        %v1371 = vmul.f32 %v1122, 1.442695
        %v1372 = vpow.pop %v1371
        %v1373 = vmul.f32 %v1123, 1.442695
        %v1374 = vpow.pop %v1373
        %v1375 = vmul.f32 %v1124, 1.442695
        %v1376 = vpow.pop %v1375
        %v1377 = vmul.f32 %v1125, 1.442695
        %v1378 = vpow.pop %v1377
        %v1379 = vmul.f32 %v1126, 1.442695
        %v1380 = vpow.pop %v1379
        %v1381 = vmul.f32 %v1127, 1.442695
        %v1382 = vpow.pop %v1381
        %v1383 = vmul.f32 %v1128, 1.442695
        %v1384 = vpow.pop %v1383
        %v1385 = vld [vmem:[%s266] sm:$0xff]
        %v1386 = vld [vmem:[%s266 + $0x8] sm:$0xff]
        %v1387 = vld [vmem:[%s266 + $0x10] sm:$0xff]
        %v1388 = vld [vmem:[%s266 + $0x18] sm:$0xff]
        %v1389 = vld [vmem:[%s266 + $0x20] sm:$0xff]
        %v1390 = vld [vmem:[%s266 + $0x28] sm:$0xff]
        %v1391 = vld [vmem:[%s266 + $0x30] sm:$0xff]
        %v1392 = vld [vmem:[%s266 + $0x38] sm:$0xff]
        %v1393 = vld [vmem:[%s266 + $0x40] sm:$0x11]
        %v1394 = vld [vmem:[%s266 + $0x48] sm:$0x11]
        %v1395 = vpack.c.bf16 %v1138, %v1130
        %v1396 = vpack.c.bf16 %v1140, %v1132
        %v1397 = vpack.c.bf16 %v1142, %v1134
        %v1398 = vpack.c.bf16 %v1144, %v1136
        %v1399 = vpack.c.bf16 %v1154, %v1146
        %v1400 = vpack.c.bf16 %v1156, %v1148
        %v1401 = vpack.c.bf16 %v1158, %v1150
        %v1402 = vpack.c.bf16 %v1160, %v1152
        %v1403 = vpack.c.bf16 %v1170, %v1162
        %v1404 = vpack.c.bf16 %v1172, %v1164
        %v1405 = vpack.c.bf16 %v1174, %v1166
        %v1406 = vpack.c.bf16 %v1176, %v1168
        %v1407 = vpack.c.bf16 %v1186, %v1178
        %v1408 = vpack.c.bf16 %v1188, %v1180
        %v1409 = vpack.c.bf16 %v1190, %v1182
        %v1410 = vpack.c.bf16 %v1192, %v1184
        %v1411 = vpack.c.bf16 %v1202, %v1194
        %v1412 = vpack.c.bf16 %v1204, %v1196
        %v1413 = vpack.c.bf16 %v1206, %v1198
        %v1414 = vpack.c.bf16 %v1208, %v1200
        %v1415 = vpack.c.bf16 %v1218, %v1210
        %v1416 = vpack.c.bf16 %v1220, %v1212
        %v1417 = vpack.c.bf16 %v1222, %v1214
        %v1418 = vpack.c.bf16 %v1224, %v1216
        %v1419 = vpack.c.bf16 %v1234, %v1226
        %v1420 = vpack.c.bf16 %v1236, %v1228
        %v1421 = vpack.c.bf16 %v1238, %v1230
        %v1422 = vpack.c.bf16 %v1240, %v1232
        %v1423 = vpack.c.bf16 %v1250, %v1242
        %v1424 = vpack.c.bf16 %v1252, %v1244
        %v1425 = vpack.c.bf16 %v1254, %v1246
        %v1426 = vpack.c.bf16 %v1256, %v1248
        %v1427 = vpack.c.bf16 %v1266, %v1258
        %v1428 = vpack.c.bf16 %v1268, %v1260
        %v1429 = vpack.c.bf16 %v1270, %v1262
        %v1430 = vpack.c.bf16 %v1272, %v1264
        %v1431 = vpack.c.bf16 %v1282, %v1274
        %v1432 = vpack.c.bf16 %v1284, %v1276
        %v1433 = vpack.c.bf16 %v1286, %v1278
        %v1434 = vpack.c.bf16 %v1288, %v1280
        %v1435 = vpack.c.bf16 %v1298, %v1290
        %v1436 = vpack.c.bf16 %v1300, %v1292
        %v1437 = vpack.c.bf16 %v1302, %v1294
        %v1438 = vpack.c.bf16 %v1304, %v1296
        %v1439 = vpack.c.bf16 %v1314, %v1306
        %v1440 = vpack.c.bf16 %v1316, %v1308
        %v1441 = vpack.c.bf16 %v1318, %v1310
        %v1442 = vpack.c.bf16 %v1320, %v1312
        %v1443 = vpack.c.bf16 %v1330, %v1322
        %v1444 = vpack.c.bf16 %v1332, %v1324
        %v1445 = vpack.c.bf16 %v1334, %v1326
        %v1446 = vpack.c.bf16 %v1336, %v1328
        %v1447 = vpack.c.bf16 %v1346, %v1338
        %v1448 = vpack.c.bf16 %v1348, %v1340
        %v1449 = vpack.c.bf16 %v1350, %v1342
        %v1450 = vpack.c.bf16 %v1352, %v1344
        %v1451 = vpack.c.bf16 %v1362, %v1354
        %v1452 = vpack.c.bf16 %v1364, %v1356
        %v1453 = vpack.c.bf16 %v1366, %v1358
        %v1454 = vpack.c.bf16 %v1368, %v1360
        %v1455 = vpack.c.bf16 %v1378, %v1370
        %v1456 = vpack.c.bf16 %v1380, %v1372
        %v1457 = vpack.c.bf16 %v1382, %v1374
        %v1458 = vpack.c.bf16 %v1384, %v1376
        %v1469 = vunpack.c.l.b16 %v1385
        %v1470 = vunpack.c.h.b16 %v1385
        %v1471 = vunpack.c.l.b16 %v1386
        %v1472 = vunpack.c.h.b16 %v1386
        %v1473 = vunpack.c.l.b16 %v1387
        %v1474 = vunpack.c.h.b16 %v1387
        %v1475 = vunpack.c.l.b16 %v1388
        %v1476 = vunpack.c.h.b16 %v1388
        %v1477 = vunpack.c.l.b16 %v1389
        %v1478 = vunpack.c.h.b16 %v1389
        %v1479 = vunpack.c.l.b16 %v1390
        %v1480 = vunpack.c.h.b16 %v1390
        %v1481 = vunpack.c.l.b16 %v1391
        %v1482 = vunpack.c.h.b16 %v1391
        %v1483 = vunpack.c.l.b16 %v1392
        %v1484 = vunpack.c.h.b16 %v1392
        %v1485 = vunpack.c.l.b16 %v1393
        %v1486 = vunpack.c.h.b16 %v1393
        %v1487 = vunpack.c.l.b16 %v1394
        %v1488 = vunpack.c.h.b16 %v1394
        %v1489 = vpack.c.b16 %v1473, %v1469
        %v1490 = vpack.c.b16 %v1474, %v1470
        %v1491 = vpack.c.b16 %v1475, %v1471
        %v1492 = vpack.c.b16 %v1476, %v1472
        %v1493 = vpack.c.b16 %v1481, %v1477
        %v1494 = vpack.c.b16 %v1482, %v1478
        %v1495 = vpack.c.b16 %v1483, %v1479
        %v1496 = vpack.c.b16 %v1484, %v1480
        %v1497 = vpack.c.b16 %v1485, %v1485
        %v1498 = vpack.c.b16 %v1486, %v1486
        %v1499 = vpack.c.b16 %v1487, %v1487
        %v1500 = vpack.c.b16 %v1488, %v1488
        %1513 = vmatprep.subr.bf16.mxu0 %v1396
        %1514 = vmatpush1.bf16.xpose.msra.mxu0 %v1395
        %1515 = vmatprep.subr.bf16.mxu0 %v1400
        %1516 = vmatpush1.bf16.xpose.msra.mxu0 %v1399
        %1517 = vmatprep.subr.bf16.mxu0 %v1404
        %1518 = vmatpush1.bf16.xpose.msra.mxu0 %v1403
        %1519 = vmatprep.subr.bf16.mxu0 %v1408
        %1520 = vmatpush1.bf16.xpose.msra.mxu0 %v1407
        %1521 = vmatprep.subr.bf16.mxu0 %v1412
        %1522 = vmatpush1.bf16.xpose.msra.mxu0 %v1411
        %1523 = vmatprep.subr.bf16.mxu0 %v1416
        %1524 = vmatpush1.bf16.xpose.msra.mxu0 %v1415
        %1525 = vmatprep.subr.bf16.mxu0 %v1420
        %1526 = vmatpush1.bf16.xpose.msra.mxu0 %v1419
        %1527 = vmatprep.subr.bf16.mxu0 %v1424
        %1528 = vmatpush1.bf16.xpose.msra.mxu0 %v1423
        %1529 = vmatprep.subr.bf16.mxu0 %v1428
        %1530 = vmatpush1.bf16.xpose.msra.mxu0 %v1427
        %1531 = vmatprep.subr.bf16.mxu0 %v1432
        %1532 = vmatpush1.bf16.xpose.msra.mxu0 %v1431
        %1533 = vmatprep.subr.bf16.mxu0 %v1436
        %1534 = vmatpush1.bf16.xpose.msra.mxu0 %v1435
        %1535 = vmatprep.subr.bf16.mxu0 %v1440
        %1536 = vmatpush1.bf16.xpose.msra.mxu0 %v1439
        %1537 = vmatprep.subr.bf16.mxu0 %v1444
        %1538 = vmatpush1.bf16.xpose.msra.mxu0 %v1443
        %1539 = vmatprep.subr.bf16.mxu0 %v1448
        %1540 = vmatpush1.bf16.xpose.msra.mxu0 %v1447
        %1541 = vmatprep.subr.bf16.mxu0 %v1452
        %1542 = vmatpush1.bf16.xpose.msra.mxu0 %v1451
        %1543 = vmatprep.subr.bf16.mxu0 %v1456
        %1544 = vmatpush1.bf16.xpose.msra.mxu0 %v1455
        %1545 = vmatprep.mubr.bf16.mxu0 %v1490
        %1546 = vmatmul.mubr.bf16.gmra.mrb[0].mxu0 %v1489
        %v1547 = vpop.f32.mrb[0].mxu0
        %v1548 = vadd.f32 0.0, %v1547
        %v1549 = vpop.f32.mrb[0].mxu0
        %v1550 = vadd.f32 0.0, %v1549
        %v1551 = vpop.f32.mrb[0].mxu0
        %v1552 = vadd.f32 0.0, %v1551
        %v1553 = vpop.f32.mrb[0].mxu0
        %v1554 = vadd.f32 0.0, %v1553
        %1555 = vmatprep.mubr.bf16.mxu0 %v1494
        %1556 = vmatmul.mubr.bf16.gmra.mrb[0].mxu0 %v1493
        %v1557 = vpop.f32.mrb[0].mxu0
        %v1558 = vadd.f32 0.0, %v1557
        %v1559 = vpop.f32.mrb[0].mxu0
        %v1560 = vadd.f32 0.0, %v1559
        %v1561 = vpop.f32.mrb[0].mxu0
        %v1562 = vadd.f32 0.0, %v1561
        %v1563 = vpop.f32.mrb[0].mxu0
        %v1564 = vadd.f32 0.0, %v1563
        %1565 = vmatprep.mubr.bf16.mxu0 %v1498
        %1566 = vmatmul.mubr.bf16.gmra.mrb[0].mxu0 %v1497
        %v1567 = vpop.f32.mrb[0].mxu0
        %v1568 = vadd.f32 0.0, %v1567
        %v1569 = vpop.f32.mrb[0].mxu0
        %v1570 = vadd.f32 0.0, %v1569
        %v1571 = vpop.f32.mrb[0].mxu0
        %v1572 = vpop.f32.mrb[0].mxu0
        %1573 = vdwg.mxu0
        %1574 = vmatprep.subr.bf16.mxu0 %v1398
        %1575 = vmatpush1.bf16.xpose.msra.mxu0 %v1397
        %1576 = vmatprep.subr.bf16.mxu0 %v1402
        %1577 = vmatpush1.bf16.xpose.msra.mxu0 %v1401
        %1578 = vmatprep.subr.bf16.mxu0 %v1406
        %1579 = vmatpush1.bf16.xpose.msra.mxu0 %v1405
        %1580 = vmatprep.subr.bf16.mxu0 %v1410
        %1581 = vmatpush1.bf16.xpose.msra.mxu0 %v1409
        %1582 = vmatprep.subr.bf16.mxu0 %v1414
        %1583 = vmatpush1.bf16.xpose.msra.mxu0 %v1413
        %1584 = vmatprep.subr.bf16.mxu0 %v1418
        %1585 = vmatpush1.bf16.xpose.msra.mxu0 %v1417
        %1586 = vmatprep.subr.bf16.mxu0 %v1422
        %1587 = vmatpush1.bf16.xpose.msra.mxu0 %v1421
        %1588 = vmatprep.subr.bf16.mxu0 %v1426
        %1589 = vmatpush1.bf16.xpose.msra.mxu0 %v1425
        %1590 = vmatprep.subr.bf16.mxu0 %v1430
        %1591 = vmatpush1.bf16.xpose.msra.mxu0 %v1429
        %1592 = vmatprep.subr.bf16.mxu0 %v1434
        %1593 = vmatpush1.bf16.xpose.msra.mxu0 %v1433
        %1594 = vmatprep.subr.bf16.mxu0 %v1438
        %1595 = vmatpush1.bf16.xpose.msra.mxu0 %v1437
        %1596 = vmatprep.subr.bf16.mxu0 %v1442
        %1597 = vmatpush1.bf16.xpose.msra.mxu0 %v1441
        %1598 = vmatprep.subr.bf16.mxu0 %v1446
        %1599 = vmatpush1.bf16.xpose.msra.mxu0 %v1445
        %1600 = vmatprep.subr.bf16.mxu0 %v1450
        %1601 = vmatpush1.bf16.xpose.msra.mxu0 %v1449
        %1602 = vmatprep.subr.bf16.mxu0 %v1454
        %1603 = vmatpush1.bf16.xpose.msra.mxu0 %v1453
        %1604 = vmatprep.subr.bf16.mxu0 %v1458
        %1605 = vmatpush1.bf16.xpose.msra.mxu0 %v1457
        %1606 = vmatprep.mubr.bf16.mxu0 %v1492
        %1607 = vmatmul.mubr.bf16.gmra.mrb[0].mxu0 %v1491
        %v1608 = vpop.f32.mrb[0].mxu0
        %v1609 = vadd.f32 %v1548, %v1608
        %v1610 = vpop.f32.mrb[0].mxu0
        %v1611 = vadd.f32 %v1550, %v1610
        %v1612 = vpop.f32.mrb[0].mxu0
        %v1613 = vadd.f32 %v1552, %v1612
        %v1614 = vpop.f32.mrb[0].mxu0
        %v1615 = vadd.f32 %v1554, %v1614
        %1616 = vmatprep.mubr.bf16.mxu0 %v1496
        %1617 = vmatmul.mubr.bf16.gmra.mrb[0].mxu0 %v1495
        %v1618 = vpop.f32.mrb[0].mxu0
        %v1619 = vadd.f32 %v1558, %v1618
        %v1620 = vpop.f32.mrb[0].mxu0
        %v1621 = vadd.f32 %v1560, %v1620
        %v1622 = vpop.f32.mrb[0].mxu0
        %v1623 = vadd.f32 %v1562, %v1622
        %v1624 = vpop.f32.mrb[0].mxu0
        %v1625 = vadd.f32 %v1564, %v1624
        %1626 = vmatprep.mubr.bf16.mxu0 %v1500
        %1627 = vmatmul.mubr.bf16.gmra.mrb[0].mxu0 %v1499
        %v1628 = vpop.f32.mrb[0].mxu0
        %v1629 = vadd.f32 %v1568, %v1628
        %v1630 = vpop.f32.mrb[0].mxu0
        %v1631 = vadd.f32 %v1570, %v1630
        %v1632 = vpop.f32.mrb[0].mxu0
        %v1633 = vpop.f32.mrb[0].mxu0
        %1634 = vdwg.mxu0
        %v1635 = vrcp.pop %v1629
        %v1636 = vrcp.pop %v1631
        %s1637 = sshra.s32 %s269, 7
        %s1638 = sand.u32 %s269, 127
        %s1639 = smul.addr %s1637, 8
        %s1640 = scalar_lea.vmem %s261, %s1639
        %v1641 = vld [vmem:[%s1640] sm:$0xff]
        %v1642 = vld [vmem:[%s1640 + $0x8] sm:$0xff]
        %v1643 = vld [vmem:[%s1640 + $0x20] sm:$0xff]
        %v1644 = vld [vmem:[%s1640 + $0x28] sm:$0xff]
        %v1645 = vld [vmem:[%s1640 + $0x40] sm:$0xff]
        %v1646 = vld [vmem:[%s1640 + $0x48] sm:$0xff]
        %v1647 = vld [vmem:[%s1640 + $0x60] sm:$0xff]
        %v1648 = vld [vmem:[%s1640 + $0x68] sm:$0xff]
        %s1649 = sld [smem:[#allocation2]]
        %v1650 = vstv %s1649
        %v1651 = vmul.f32 %v1650, %v1635
        %v1652 = vmul.f32 %v1650, %v1636
        %v1653 = vlaneseq
        %v1654 = vshrl.u32 %v1653, 7
        %v1655 = vsub.s32 0, %v1654
        %v1656 = vrot.slane %v1651, %v1655
        %v1657 = vlaneseq
        %v1658 = vshrl.u32 %v1657, 7
        %v1659 = vsub.s32 0, %v1658
        %v1660 = vrot.slane %v1652, %v1659
        %v1661 = vmul.f32 %v1656, %v1609
        %v1662 = vmul.f32 %v1660, %v1611
        %v1663 = vmul.f32 %v1656, %v1613
        %v1664 = vmul.f32 %v1660, %v1615
        %v1665 = vmul.f32 %v1656, %v1619
        %v1666 = vmul.f32 %v1660, %v1621
        %v1667 = vmul.f32 %v1656, %v1623
        %v1668 = vmul.f32 %v1660, %v1625
        %v1669 = vadd.f32 %v1661, %v1641
        %v1670 = vadd.f32 %v1662, %v1642
        %v1671 = vadd.f32 %v1663, %v1643
        %v1672 = vadd.f32 %v1664, %v1644
        %v1673 = vadd.f32 %v1665, %v1645
        %v1674 = vadd.f32 %v1666, %v1646
        %v1675 = vadd.f32 %v1667, %v1647
        %v1676 = vadd.f32 %v1668, %v1648
        %1677 = vst [vmem:[%s246] sm:$0xff] %v1669
        %1678 = vst [vmem:[%s246 + $0x8] sm:$0xff] %v1670
        %1679 = vst [vmem:[%s246 + $0x10] sm:$0xff] %v1671
        %1680 = vst [vmem:[%s246 + $0x18] sm:$0xff] %v1672
        %1681 = vst [vmem:[%s246 + $0x20] sm:$0xff] %v1673
        %1682 = vst [vmem:[%s246 + $0x28] sm:$0xff] %v1674
        %1683 = vst [vmem:[%s246 + $0x30] sm:$0xff] %v1675
        %1684 = vst [vmem:[%s246 + $0x38] sm:$0xff] %v1676
        %s1685 = sand.u32 %s142, 1
        %s1686 = scalar_lea.sflag [#allocation4], %s1685
        %s1687 = sand.u32 %s142, 1
        %s1688 = smul.addr %s1687, 64
        %s1689 = scalar_lea.vmem [#allocation3], %s1688
        // Predicated region
        $region37: #{tpu_custom_call.1} parent=35 // pred_check
          %p1690 = pneg %p152
        $region38: #{tpu_custom_call.1} parent=35 // pred_check_branch
          %1692 = sbr.rel (%p1690) target = $region40
        $region39: #{tpu_custom_call.1} parent=35 // pred_region
          %s1693 = smul.u32 2, %s24
          %s1695 = ssub.s32 1024, 1024
          %1696 = vsyncadd %s1686, %s1695
          %s1697 = smul.addr %s23, 16
          %s1698 = sadd.s32 %s1693, %s1697
          %s1699 = smul.addr %s1698, 128
          %s1700 = scalar_lea.hbm %s4, %s1699
          %s1701 = sshll.u32 %s1689, 4
          %s1702 = int_to_ptr.vmem [resolvable:$true] %s1701
          %1707 = dma.vmem_to_hbm [thread:$0]  %s1702, 1024, %s1700, %s1686, 256, 512, 16
        $region40: #{tpu_custom_call.1} parent=35 // pred_fallthru
          _
      $region36: #{tpu_custom_call.1} parent=5 // pred_fallthru
        _
      %p1708 = scmp.le.s32.totalorder 2, %s14
      // Predicated region
      $region41: #{tpu_custom_call.1} parent=5 // pred_check
        %p1709 = pneg %p1708
      $region42: #{tpu_custom_call.1} parent=5 // pred_check_branch
        %1711 = sbr.rel (%p1709) target = $region44
      $region43: #{tpu_custom_call.1} parent=5 // pred_region
        %s1712 = ssub.s32 %s14, 2
        // Predicated region
        $region45: #{tpu_custom_call.1} parent=43 // pred_check
          %p1713 = pneg %p158
        $region46: #{tpu_custom_call.1} parent=43 // pred_check_branch
          %1715 = sbr.rel (%p1713) target = $region48
        $region47: #{tpu_custom_call.1} parent=43 // pred_region
          %s1716 = sand.u32 %s143, 1
          %s1717 = scalar_lea.sflag [#allocation4], %s1716
          %s1718 = sand.u32 %s143, 1
          %s1719 = smul.addr %s1718, 64
          %s1720 = scalar_lea.vmem [#allocation3], %s1719
          %1721 = dma.done %s1717, 1024
        $region48: #{tpu_custom_call.1} parent=43 // pred_fallthru
          _
      $region44: #{tpu_custom_call.1} parent=5 // pred_fallthru
        _
    $region6: #{tpu_custom_call.1} parent=1 // loop_footer
      %s18 = sadd.s32 1, %s14
    $region7: #{tpu_custom_call.1} parent=1 // loop_footer_branch
      %13 = sbr.rel target = $region3
    $region8: #{tpu_custom_call.1} parent=1 // loop_exit
      _
    %1722 = vsyncpa [#allocation4], 1
    %s1723 = scalar_lea.sflag [#allocation4], 1
    %1724 = vsyncpa %s1723, 1

</llo_original>
